<compile_context>
chip_gen: v7x
topology: tpu7x:2x2x1
jax: 0.10.0
libtpu: 0.0.40
codegen_flags: <defaults>
</compile_context>

<pallas_src>
import functools

import jax
import jax.numpy as jnp
import numpy as np
from jax.experimental import pallas as pl
from jax.experimental.pallas import tpu as pltpu

BN_EPS = 1e-5
VMEM_LIMIT_BYTES = 32 * 1024 * 1024


def _round_up(x, m):
    return ((x + m - 1) // m) * m


def _tap_conv(pad_ref, w_ref, Hp, Wp, CoP):
    """3x3 conv as 9 tap-accumulated MXU matmuls (bf16 in, f32 accumulate).

    pad_ref: (1, Hp+2, Wp+2, Cin) bf16 zero-padded activations (VMEM scratch)
    w_ref:   (9, Cin, CoP) bf16 weights, one (Cin, CoP) slab per tap
    returns  (Hp*Wp, CoP) f32 accumulator value
    """
    M = Hp * Wp
    Cin = pad_ref.shape[-1]
    acc = jnp.zeros((M, CoP), jnp.float32)
    for kh in range(3):
        for kw in range(3):
            t = kh * 3 + kw
            slab = pad_ref[:, pl.ds(kh, Hp), pl.ds(kw, Wp), :].reshape(M, Cin)
            acc = acc + jnp.dot(slab, w_ref[t],
                                preferred_element_type=jnp.float32)
    return acc


def _pool_conv_kernel(x_ref, w_ref, y_ref, st_ref, pad_ref, *, Hp, Wp, Ci, CoP):
    """MaxPool2d(2) + conv1 (pre-BN) + per-batch BN1 sum/sumsq partials."""
    # x_ref : (1, Hp, 2, Wp, 2*Ci) f32  -- free reshape of NHWC x
    # w_ref : (9, Ci, CoP)         bf16
    # y_ref : (1, Hp*Wp, CoP)      f32  -- conv1 pre-BN output (lane-dense)
    # st_ref: (1, 2, CoP)          f32  -- [sum, sumsq] partials
    # pad_ref: (1, Hp+2, Wp+2, Ci) bf16 -- zero-padded activation scratch
    xa = x_ref[0]                                     # (Hp, 2, Wp, 2*Ci)
    rmax = jnp.maximum(xa[:, 0], xa[:, 1])            # max over pool rows
    pooled = jnp.maximum(rmax[..., :Ci], rmax[..., Ci:])   # max over pool cols

    # Zero the whole padded buffer once (single unmasked store), then write
    # the interior; cast to bf16 exactly once here.
    pad_ref[...] = jnp.zeros(pad_ref.shape, jnp.bfloat16)
    pad_ref[:, pl.ds(1, Hp), pl.ds(1, Wp), :] = (
        pooled.astype(jnp.bfloat16).reshape(1, Hp, Wp, Ci))

    acc = _tap_conv(pad_ref, w_ref, Hp, Wp, CoP)      # (M, CoP) f32
    y_ref[...] = acc.reshape(1, Hp * Wp, CoP)
    st_ref[:, pl.ds(0, 1), :] = jnp.sum(acc, axis=0, keepdims=True).reshape(1, 1, CoP)
    st_ref[:, pl.ds(1, 1), :] = jnp.sum(acc * acc, axis=0, keepdims=True).reshape(1, 1, CoP)


def _bn_relu_conv_kernel(y_ref, sc_ref, sh_ref, w_ref, o_ref, st_ref, pad_ref,
                         *, Hp, Wp, CoP):
    """BN1 apply (folded scale/shift) + ReLU + conv2 (pre-BN) + BN2 partials."""
    # y_ref : (1, M, CoP) f32 ; sc_ref/sh_ref: (1, CoP) f32
    # w_ref : (9, CoP, CoP) bf16 ; o_ref: (1, M, CoP) f32 ; st_ref: (1, 2, CoP)
    # pad_ref: (1, Hp+2, Wp+2, CoP) bf16
    h = jnp.maximum(y_ref[...] * sc_ref[...] + sh_ref[...], 0.0)   # (1, M, CoP)

    pad_ref[...] = jnp.zeros(pad_ref.shape, jnp.bfloat16)
    pad_ref[:, pl.ds(1, Hp), pl.ds(1, Wp), :] = (
        h.astype(jnp.bfloat16).reshape(1, Hp, Wp, CoP))

    acc = _tap_conv(pad_ref, w_ref, Hp, Wp, CoP)      # (M, CoP) f32
    o_ref[...] = acc.reshape(1, Hp * Wp, CoP)
    st_ref[:, pl.ds(0, 1), :] = jnp.sum(acc, axis=0, keepdims=True).reshape(1, 1, CoP)
    st_ref[:, pl.ds(1, 1), :] = jnp.sum(acc * acc, axis=0, keepdims=True).reshape(1, 1, CoP)


def _bn_relu_kernel(y_ref, sc_ref, sh_ref, o_ref):
    """Final BN2 apply (folded scale/shift) + ReLU, lane-dense store."""
    o_ref[...] = jnp.maximum(y_ref[...] * sc_ref[...] + sh_ref[...], 0.0)


def downsamp_forward(x_nchw, params):
    """x_nchw: (N, Ci, H, W) float32 -> (N, Co2, H//2, W//2) float32."""
    (w1, b1, g1, be1, w2, b2, g2, be2) = params
    del b1, b2  # conv bias cancels exactly under training-mode BatchNorm
    N, Ci, H, W = x_nchw.shape
    Hp, Wp = H // 2, W // 2
    M = Hp * Wp
    Co1, Co2 = w1.shape[0], w2.shape[0]
    CoP = _round_up(max(Co1, Co2), 128)               # lane-dense channels

    # NCHW -> NHWC (one transpose) followed by a contiguity-preserving (free)
    # reshape that exposes the 2x2 pool window as (row-parity, col-parity)
    # without any extra HBM pass: (N, Hp, 2, Wp, 2*Ci).
    x = jnp.transpose(x_nchw, (0, 2, 3, 1))
    xr = x.reshape(N, Hp, 2, Wp, 2 * Ci)

    # PyTorch OIHW conv weights -> per-tap (9, cin_pad, CoP) bf16 slabs.
    def prep_w(w, cin, cin_pad, co):
        wt = jnp.transpose(w, (2, 3, 1, 0)).reshape(9, cin, co)
        wt = jnp.pad(wt, ((0, 0), (0, cin_pad - cin), (0, CoP - co)))
        return wt.astype(jnp.bfloat16)

    w1t = prep_w(w1, Ci, Ci, Co1)                     # (9, Ci, CoP)
    w2t = prep_w(w2, Co1, CoP, Co2)                   # (9, CoP, CoP)

    g1p = jnp.pad(g1, (0, CoP - Co1)).astype(jnp.float32)
    be1p = jnp.pad(be1, (0, CoP - Co1)).astype(jnp.float32)
    g2p = jnp.pad(g2, (0, CoP - Co2)).astype(jnp.float32)
    be2p = jnp.pad(be2, (0, CoP - Co2)).astype(jnp.float32)

    cparams = pltpu.CompilerParams(
        dimension_semantics=("parallel",),
        vmem_limit_bytes=VMEM_LIMIT_BYTES,
    )

    def fold_bn(stats, gamma_p, beta_p):
        # stats: (N, 2, CoP) per-batch [sum, sumsq] -> per-channel scale/shift
        s = jnp.sum(stats, axis=0)
        mean = s[0] / (N * M)
        var = jnp.maximum(s[1] / (N * M) - mean * mean, 0.0)   # biased var
        scale = gamma_p * jax.lax.rsqrt(var + BN_EPS)
        shift = beta_p - mean * scale
        return scale.reshape(1, CoP), shift.reshape(1, CoP)

    # ---- call 1: MaxPool2d(2) + conv1 (pre-BN) + BN1 partials -------------
    y1, st1 = pl.pallas_call(
        functools.partial(_pool_conv_kernel, Hp=Hp, Wp=Wp, Ci=Ci, CoP=CoP),
        grid=(N,),
        in_specs=[
            pl.BlockSpec((1, Hp, 2, Wp, 2 * Ci), lambda n: (n, 0, 0, 0, 0)),
            pl.BlockSpec((9, Ci, CoP), lambda n: (0, 0, 0)),
        ],
        out_specs=(
            pl.BlockSpec((1, M, CoP), lambda n: (n, 0, 0)),
            pl.BlockSpec((1, 2, CoP), lambda n: (n, 0, 0)),
        ),
        out_shape=(
            jax.ShapeDtypeStruct((N, M, CoP), jnp.float32),
            jax.ShapeDtypeStruct((N, 2, CoP), jnp.float32),
        ),
        scratch_shapes=[pltpu.VMEM((1, Hp + 2, Wp + 2, Ci), jnp.bfloat16)],
        compiler_params=cparams,
        cost_estimate=pl.CostEstimate(
            flops=2 * N * M * 9 * Ci * CoP,
            transcendentals=0,
            bytes_accessed=(xr.size * 4 + w1t.size * 2
                            + N * M * CoP * 4 + N * 2 * CoP * 4)),
    )(xr, w1t)

    sc1, sh1 = fold_bn(st1, g1p, be1p)

    # ---- call 2: BN1 apply + ReLU + conv2 (pre-BN) + BN2 partials ---------
    y2, st2 = pl.pallas_call(
        functools.partial(_bn_relu_conv_kernel, Hp=Hp, Wp=Wp, CoP=CoP),
        grid=(N,),
        in_specs=[
            pl.BlockSpec((1, M, CoP), lambda n: (n, 0, 0)),
            pl.BlockSpec((1, CoP), lambda n: (0, 0)),
            pl.BlockSpec((1, CoP), lambda n: (0, 0)),
            pl.BlockSpec((9, CoP, CoP), lambda n: (0, 0, 0)),
        ],
        out_specs=(
            pl.BlockSpec((1, M, CoP), lambda n: (n, 0, 0)),
            pl.BlockSpec((1, 2, CoP), lambda n: (n, 0, 0)),
        ),
        out_shape=(
            jax.ShapeDtypeStruct((N, M, CoP), jnp.float32),
            jax.ShapeDtypeStruct((N, 2, CoP), jnp.float32),
        ),
        scratch_shapes=[pltpu.VMEM((1, Hp + 2, Wp + 2, CoP), jnp.bfloat16)],
        compiler_params=cparams,
        cost_estimate=pl.CostEstimate(
            flops=2 * N * M * 9 * CoP * CoP,
            transcendentals=0,
            bytes_accessed=(2 * N * M * CoP * 4 + w2t.size * 2
                            + N * 2 * CoP * 4)),
    )(y1, sc1, sh1, w2t)

    sc2, sh2 = fold_bn(st2, g2p, be2p)

    # ---- call 3: BN2 apply + ReLU ------------------------------------------
    out = pl.pallas_call(
        _bn_relu_kernel,
        grid=(N,),
        in_specs=[
            pl.BlockSpec((1, M, CoP), lambda n: (n, 0, 0)),
            pl.BlockSpec((1, CoP), lambda n: (0, 0)),
            pl.BlockSpec((1, CoP), lambda n: (0, 0)),
        ],
        out_specs=pl.BlockSpec((1, M, CoP), lambda n: (n, 0, 0)),
        out_shape=jax.ShapeDtypeStruct((N, M, CoP), jnp.float32),
        compiler_params=cparams,
        cost_estimate=pl.CostEstimate(
            flops=2 * N * M * CoP,
            transcendentals=0,
            bytes_accessed=2 * N * M * CoP * 4),
    )(y2, sc2, sh2)

    out = out.reshape(N, Hp, Wp, CoP)[:, :, :, :Co2]  # drop lane padding
    return jnp.transpose(out, (0, 3, 1, 2))           # back to NCHW


def ref_forward(x, params):
    """Pure-JAX reference with the same (training-mode BN) semantics, NCHW."""
    (w1, b1, g1, be1, w2, b2, g2, be2) = params
    x = jax.lax.reduce_window(x, -jnp.inf, jax.lax.max,
                              (1, 1, 2, 2), (1, 1, 2, 2), 'VALID')

    def block(x, w, b, g, be):
        y = jax.lax.conv_general_dilated(
            x, w, (1, 1), ((1, 1), (1, 1)),
            dimension_numbers=('NCHW', 'OIHW', 'NCHW'))
        y = y + b[None, :, None, None]
        mean = jnp.mean(y, axis=(0, 2, 3), keepdims=True)
        var = jnp.mean(jnp.square(y - mean), axis=(0, 2, 3), keepdims=True)
        y = (y - mean) * jax.lax.rsqrt(var + BN_EPS)
        y = y * g[None, :, None, None] + be[None, :, None, None]
        return jnp.maximum(y, 0.0)

    x = block(x, w1, b1, g1, be1)
    x = block(x, w2, b2, g2, be2)
    return x


if __name__ == "__main__":
    N, Ci, H, W = 2, 4, 16, 16
    Co = 8

    key = jax.random.PRNGKey(0)
    ks = jax.random.split(key, 9)
    x = jax.random.normal(ks[0], (N, Ci, H, W), jnp.float32)

    w1 = jax.random.normal(ks[1], (Co, Ci, 3, 3), jnp.float32) / np.sqrt(Ci * 9)
    b1 = 0.1 * jax.random.normal(ks[2], (Co,), jnp.float32)
    g1 = 1.0 + 0.1 * jax.random.normal(ks[3], (Co,), jnp.float32)
    be1 = 0.1 * jax.random.normal(ks[4], (Co,), jnp.float32)
    w2 = jax.random.normal(ks[5], (Co, Co, 3, 3), jnp.float32) / np.sqrt(Co * 9)
    b2 = 0.1 * jax.random.normal(ks[6], (Co,), jnp.float32)
    g2 = 1.0 + 0.1 * jax.random.normal(ks[7], (Co,), jnp.float32)
    be2 = 0.1 * jax.random.normal(ks[8], (Co,), jnp.float32)
    params = (w1, b1, g1, be1, w2, b2, g2, be2)

    out = jax.block_until_ready(downsamp_forward(x, params))
    ref = jax.block_until_ready(ref_forward(x, params))

    assert out.shape == (N, Co, H // 2, W // 2), out.shape
    np.testing.assert_allclose(np.asarray(out), np.asarray(ref),
                               rtol=5e-2, atol=5e-2)
    print("KERNEL_OK")
</pallas_src>

<mosaic_0001>
module attributes {stable_mosaic.version = 11 : i64} {
  func.func @_pool_conv_kernel(%arg0: i32, %arg1: memref<1x8x2x8x8xf32, #tpu.memory_space<vmem>>, %arg2: memref<9x4x128xbf16, #tpu.memory_space<vmem>>, %arg3: memref<1x64x128xf32, #tpu.memory_space<vmem>>, %arg4: memref<1x2x128xf32, #tpu.memory_space<vmem>>, %arg5: memref<1x10x10x4xbf16, #tpu.memory_space<vmem>>) attributes {dimension_semantics = [#tpu.dimension_semantics<parallel>], iteration_bounds = array<i64: 2>, scalar_prefetch = 0 : i64, scratch_operands = 1 : i64, tpu.core_type = #tpu.core_type<tc>, window_params = [{transform_indices = @transform_0, window_bounds = array<i64: 1, 8, 2, 8, 8>}, {pipeline_mode = #tpu.pipeline_mode<synchronous>, transform_indices = @transform_1, window_bounds = array<i64: 9, 4, 128>}, {transform_indices = @transform_2, window_bounds = array<i64: 1, 64, 128>}, {transform_indices = @transform_3, window_bounds = array<i64: 1, 2, 128>}]} {
    %c0 = arith.constant 0 : index
    %c0_0 = arith.constant 0 : index
    %c0_1 = arith.constant 0 : index
    %c0_2 = arith.constant 0 : index
    %c0_3 = arith.constant 0 : index
    %0 = vector.load %arg1[%c0, %c0_0, %c0_1, %c0_2, %c0_3] : memref<1x8x2x8x8xf32, #tpu.memory_space<vmem>>, vector<1x8x2x8x8xf32>
    %1 = vector.shape_cast %0 : vector<1x8x2x8x8xf32> to vector<8x2x8x8xf32>
    %2 = vector.extract_strided_slice %1 {offsets = [0, 0, 0, 0], sizes = [8, 1, 8, 8], strides = [1, 1, 1, 1]} : vector<8x2x8x8xf32> to vector<8x1x8x8xf32>
    %3 = vector.shape_cast %2 : vector<8x1x8x8xf32> to vector<8x8x8xf32>
    %4 = vector.extract_strided_slice %1 {offsets = [0, 1, 0, 0], sizes = [8, 1, 8, 8], strides = [1, 1, 1, 1]} : vector<8x2x8x8xf32> to vector<8x1x8x8xf32>
    %5 = vector.shape_cast %4 : vector<8x1x8x8xf32> to vector<8x8x8xf32>
    %6 = arith.maximumf %3, %5 : vector<8x8x8xf32>
    %7 = vector.extract_strided_slice %6 {offsets = [0, 0, 0], sizes = [8, 8, 4], strides = [1, 1, 1]} : vector<8x8x8xf32> to vector<8x8x4xf32>
    %8 = vector.extract_strided_slice %6 {offsets = [0, 0, 4], sizes = [8, 8, 4], strides = [1, 1, 1]} : vector<8x8x8xf32> to vector<8x8x4xf32>
    %9 = arith.maximumf %7, %8 : vector<8x8x4xf32>
    %cst = arith.constant 0.000000e+00 : bf16
    %10 = vector.broadcast %cst : bf16 to vector<1x10x10x4xbf16>
    %c0_4 = arith.constant 0 : index
    %c0_5 = arith.constant 0 : index
    %c0_6 = arith.constant 0 : index
    %c0_7 = arith.constant 0 : index
    %11 = vector.load %arg5[%c0_4, %c0_5, %c0_6, %c0_7] : memref<1x10x10x4xbf16, #tpu.memory_space<vmem>>, vector<1x10x10x4xbf16>
    tpu.vector_store %arg5[%c0_4, %c0_5, %c0_6, %c0_7], %10 {strides = array<i32>} : memref<1x10x10x4xbf16, #tpu.memory_space<vmem>>, vector<1x10x10x4xbf16>,
    %12 = arith.truncf %9 : vector<8x8x4xf32> to vector<8x8x4xbf16>
    %13 = vector.shape_cast %12 : vector<8x8x4xbf16> to vector<1x8x8x4xbf16>
    %c0_8 = arith.constant 0 : index
    %c1 = arith.constant 1 : index
    %c1_9 = arith.constant 1 : index
    %c0_10 = arith.constant 0 : index
    %14 = vector.load %arg5[%c0_8, %c1, %c1_9, %c0_10] : memref<1x10x10x4xbf16, #tpu.memory_space<vmem>>, vector<1x8x8x4xbf16>
    tpu.vector_store %arg5[%c0_8, %c1, %c1_9, %c0_10], %13 {strides = array<i32>} : memref<1x10x10x4xbf16, #tpu.memory_space<vmem>>, vector<1x8x8x4xbf16>,
    %cst_11 = arith.constant 0.000000e+00 : f32
    %15 = vector.broadcast %cst_11 : f32 to vector<64x128xf32>
    %c0_12 = arith.constant 0 : index
    %c0_13 = arith.constant 0 : index
    %c0_14 = arith.constant 0 : index
    %c0_15 = arith.constant 0 : index
    %16 = vector.load %arg5[%c0_12, %c0_13, %c0_14, %c0_15] : memref<1x10x10x4xbf16, #tpu.memory_space<vmem>>, vector<1x8x8x4xbf16>
    %17 = vector.shape_cast %16 : vector<1x8x8x4xbf16> to vector<64x4xbf16>
    %c0_16 = arith.constant 0 : index
    %c0_17 = arith.constant 0 : index
    %c0_18 = arith.constant 0 : index
    %18 = vector.load %arg2[%c0_16, %c0_17, %c0_18] : memref<9x4x128xbf16, #tpu.memory_space<vmem>>, vector<1x4x128xbf16>
    %19 = vector.shape_cast %18 : vector<1x4x128xbf16> to vector<4x128xbf16>
    %cst_19 = arith.constant dense<0.000000e+00> : vector<64x128xf32>
    %20 = tpu.matmul %17, %19, %cst_19 {dimension_numbers = #tpu.dot_dimension_numbers<[1], [0], [0], [1], [0, 0, 1, 1], [], []>} : vector<64x4xbf16>, vector<4x128xbf16>, vector<64x128xf32> -> vector<64x128xf32>
    %21 = arith.addf %15, %20 : vector<64x128xf32>
    %c0_20 = arith.constant 0 : index
    %c0_21 = arith.constant 0 : index
    %c1_22 = arith.constant 1 : index
    %c0_23 = arith.constant 0 : index
    %22 = vector.load %arg5[%c0_20, %c0_21, %c1_22, %c0_23] : memref<1x10x10x4xbf16, #tpu.memory_space<vmem>>, vector<1x8x8x4xbf16>
    %23 = vector.shape_cast %22 : vector<1x8x8x4xbf16> to vector<64x4xbf16>
    %c1_24 = arith.constant 1 : index
    %c0_25 = arith.constant 0 : index
    %c0_26 = arith.constant 0 : index
    %24 = vector.load %arg2[%c1_24, %c0_25, %c0_26] : memref<9x4x128xbf16, #tpu.memory_space<vmem>>, vector<1x4x128xbf16>
    %25 = vector.shape_cast %24 : vector<1x4x128xbf16> to vector<4x128xbf16>
    %cst_27 = arith.constant dense<0.000000e+00> : vector<64x128xf32>
    %26 = tpu.matmul %23, %25, %cst_27 {dimension_numbers = #tpu.dot_dimension_numbers<[1], [0], [0], [1], [0, 0, 1, 1], [], []>} : vector<64x4xbf16>, vector<4x128xbf16>, vector<64x128xf32> -> vector<64x128xf32>
    %27 = arith.addf %21, %26 : vector<64x128xf32>
    %c0_28 = arith.constant 0 : index
    %c0_29 = arith.constant 0 : index
    %c2 = arith.constant 2 : index
    %c0_30 = arith.constant 0 : index
    %28 = vector.load %arg5[%c0_28, %c0_29, %c2, %c0_30] : memref<1x10x10x4xbf16, #tpu.memory_space<vmem>>, vector<1x8x8x4xbf16>
    %29 = vector.shape_cast %28 : vector<1x8x8x4xbf16> to vector<64x4xbf16>
    %c2_31 = arith.constant 2 : index
    %c0_32 = arith.constant 0 : index
    %c0_33 = arith.constant 0 : index
    %30 = vector.load %arg2[%c2_31, %c0_32, %c0_33] : memref<9x4x128xbf16, #tpu.memory_space<vmem>>, vector<1x4x128xbf16>
    %31 = vector.shape_cast %30 : vector<1x4x128xbf16> to vector<4x128xbf16>
    %cst_34 = arith.constant dense<0.000000e+00> : vector<64x128xf32>
    %32 = tpu.matmul %29, %31, %cst_34 {dimension_numbers = #tpu.dot_dimension_numbers<[1], [0], [0], [1], [0, 0, 1, 1], [], []>} : vector<64x4xbf16>, vector<4x128xbf16>, vector<64x128xf32> -> vector<64x128xf32>
    %33 = arith.addf %27, %32 : vector<64x128xf32>
    %c0_35 = arith.constant 0 : index
    %c1_36 = arith.constant 1 : index
    %c0_37 = arith.constant 0 : index
    %c0_38 = arith.constant 0 : index
    %34 = vector.load %arg5[%c0_35, %c1_36, %c0_37, %c0_38] : memref<1x10x10x4xbf16, #tpu.memory_space<vmem>>, vector<1x8x8x4xbf16>
    %35 = vector.shape_cast %34 : vector<1x8x8x4xbf16> to vector<64x4xbf16>
    %c3 = arith.constant 3 : index
    %c0_39 = arith.constant 0 : index
    %c0_40 = arith.constant 0 : index
    %36 = vector.load %arg2[%c3, %c0_39, %c0_40] : memref<9x4x128xbf16, #tpu.memory_space<vmem>>, vector<1x4x128xbf16>
    %37 = vector.shape_cast %36 : vector<1x4x128xbf16> to vector<4x128xbf16>
    %cst_41 = arith.constant dense<0.000000e+00> : vector<64x128xf32>
    %38 = tpu.matmul %35, %37, %cst_41 {dimension_numbers = #tpu.dot_dimension_numbers<[1], [0], [0], [1], [0, 0, 1, 1], [], []>} : vector<64x4xbf16>, vector<4x128xbf16>, vector<64x128xf32> -> vector<64x128xf32>
    %39 = arith.addf %33, %38 : vector<64x128xf32>
    %c0_42 = arith.constant 0 : index
    %c1_43 = arith.constant 1 : index
    %c1_44 = arith.constant 1 : index
    %c0_45 = arith.constant 0 : index
    %40 = vector.load %arg5[%c0_42, %c1_43, %c1_44, %c0_45] : memref<1x10x10x4xbf16, #tpu.memory_space<vmem>>, vector<1x8x8x4xbf16>
    %41 = vector.shape_cast %40 : vector<1x8x8x4xbf16> to vector<64x4xbf16>
    %c4 = arith.constant 4 : index
    %c0_46 = arith.constant 0 : index
    %c0_47 = arith.constant 0 : index
    %42 = vector.load %arg2[%c4, %c0_46, %c0_47] : memref<9x4x128xbf16, #tpu.memory_space<vmem>>, vector<1x4x128xbf16>
    %43 = vector.shape_cast %42 : vector<1x4x128xbf16> to vector<4x128xbf16>
    %cst_48 = arith.constant dense<0.000000e+00> : vector<64x128xf32>
    %44 = tpu.matmul %41, %43, %cst_48 {dimension_numbers = #tpu.dot_dimension_numbers<[1], [0], [0], [1], [0, 0, 1, 1], [], []>} : vector<64x4xbf16>, vector<4x128xbf16>, vector<64x128xf32> -> vector<64x128xf32>
    %45 = arith.addf %39, %44 : vector<64x128xf32>
    %c0_49 = arith.constant 0 : index
    %c1_50 = arith.constant 1 : index
    %c2_51 = arith.constant 2 : index
    %c0_52 = arith.constant 0 : index
    %46 = vector.load %arg5[%c0_49, %c1_50, %c2_51, %c0_52] : memref<1x10x10x4xbf16, #tpu.memory_space<vmem>>, vector<1x8x8x4xbf16>
    %47 = vector.shape_cast %46 : vector<1x8x8x4xbf16> to vector<64x4xbf16>
    %c5 = arith.constant 5 : index
    %c0_53 = arith.constant 0 : index
    %c0_54 = arith.constant 0 : index
    %48 = vector.load %arg2[%c5, %c0_53, %c0_54] : memref<9x4x128xbf16, #tpu.memory_space<vmem>>, vector<1x4x128xbf16>
    %49 = vector.shape_cast %48 : vector<1x4x128xbf16> to vector<4x128xbf16>
    %cst_55 = arith.constant dense<0.000000e+00> : vector<64x128xf32>
    %50 = tpu.matmul %47, %49, %cst_55 {dimension_numbers = #tpu.dot_dimension_numbers<[1], [0], [0], [1], [0, 0, 1, 1], [], []>} : vector<64x4xbf16>, vector<4x128xbf16>, vector<64x128xf32> -> vector<64x128xf32>
    %51 = arith.addf %45, %50 : vector<64x128xf32>
    %c0_56 = arith.constant 0 : index
    %c2_57 = arith.constant 2 : index
    %c0_58 = arith.constant 0 : index
    %c0_59 = arith.constant 0 : index
    %52 = vector.load %arg5[%c0_56, %c2_57, %c0_58, %c0_59] : memref<1x10x10x4xbf16, #tpu.memory_space<vmem>>, vector<1x8x8x4xbf16>
    %53 = vector.shape_cast %52 : vector<1x8x8x4xbf16> to vector<64x4xbf16>
    %c6 = arith.constant 6 : index
    %c0_60 = arith.constant 0 : index
    %c0_61 = arith.constant 0 : index
    %54 = vector.load %arg2[%c6, %c0_60, %c0_61] : memref<9x4x128xbf16, #tpu.memory_space<vmem>>, vector<1x4x128xbf16>
    %55 = vector.shape_cast %54 : vector<1x4x128xbf16> to vector<4x128xbf16>
    %cst_62 = arith.constant dense<0.000000e+00> : vector<64x128xf32>
    %56 = tpu.matmul %53, %55, %cst_62 {dimension_numbers = #tpu.dot_dimension_numbers<[1], [0], [0], [1], [0, 0, 1, 1], [], []>} : vector<64x4xbf16>, vector<4x128xbf16>, vector<64x128xf32> -> vector<64x128xf32>
    %57 = arith.addf %51, %56 : vector<64x128xf32>
    %c0_63 = arith.constant 0 : index
    %c2_64 = arith.constant 2 : index
    %c1_65 = arith.constant 1 : index
    %c0_66 = arith.constant 0 : index
    %58 = vector.load %arg5[%c0_63, %c2_64, %c1_65, %c0_66] : memref<1x10x10x4xbf16, #tpu.memory_space<vmem>>, vector<1x8x8x4xbf16>
    %59 = vector.shape_cast %58 : vector<1x8x8x4xbf16> to vector<64x4xbf16>
    %c7 = arith.constant 7 : index
    %c0_67 = arith.constant 0 : index
    %c0_68 = arith.constant 0 : index
    %60 = vector.load %arg2[%c7, %c0_67, %c0_68] : memref<9x4x128xbf16, #tpu.memory_space<vmem>>, vector<1x4x128xbf16>
    %61 = vector.shape_cast %60 : vector<1x4x128xbf16> to vector<4x128xbf16>
    %cst_69 = arith.constant dense<0.000000e+00> : vector<64x128xf32>
    %62 = tpu.matmul %59, %61, %cst_69 {dimension_numbers = #tpu.dot_dimension_numbers<[1], [0], [0], [1], [0, 0, 1, 1], [], []>} : vector<64x4xbf16>, vector<4x128xbf16>, vector<64x128xf32> -> vector<64x128xf32>
    %63 = arith.addf %57, %62 : vector<64x128xf32>
    %c0_70 = arith.constant 0 : index
    %c2_71 = arith.constant 2 : index
    %c2_72 = arith.constant 2 : index
    %c0_73 = arith.constant 0 : index
    %64 = vector.load %arg5[%c0_70, %c2_71, %c2_72, %c0_73] : memref<1x10x10x4xbf16, #tpu.memory_space<vmem>>, vector<1x8x8x4xbf16>
    %65 = vector.shape_cast %64 : vector<1x8x8x4xbf16> to vector<64x4xbf16>
    %c8 = arith.constant 8 : index
    %c0_74 = arith.constant 0 : index
    %c0_75 = arith.constant 0 : index
    %66 = vector.load %arg2[%c8, %c0_74, %c0_75] : memref<9x4x128xbf16, #tpu.memory_space<vmem>>, vector<1x4x128xbf16>
    %67 = vector.shape_cast %66 : vector<1x4x128xbf16> to vector<4x128xbf16>
    %cst_76 = arith.constant dense<0.000000e+00> : vector<64x128xf32>
    %68 = tpu.matmul %65, %67, %cst_76 {dimension_numbers = #tpu.dot_dimension_numbers<[1], [0], [0], [1], [0, 0, 1, 1], [], []>} : vector<64x4xbf16>, vector<4x128xbf16>, vector<64x128xf32> -> vector<64x128xf32>
    %69 = arith.addf %63, %68 : vector<64x128xf32>
    %70 = vector.shape_cast %69 : vector<64x128xf32> to vector<1x64x128xf32>
    %c0_77 = arith.constant 0 : index
    %c0_78 = arith.constant 0 : index
    %c0_79 = arith.constant 0 : index
    %71 = vector.load %arg3[%c0_77, %c0_78, %c0_79] : memref<1x64x128xf32, #tpu.memory_space<vmem>>, vector<1x64x128xf32>
    tpu.vector_store %arg3[%c0_77, %c0_78, %c0_79], %70 {strides = array<i32>} : memref<1x64x128xf32, #tpu.memory_space<vmem>>, vector<1x64x128xf32>,
    %cst_80 = arith.constant dense<0.000000e+00> : vector<128xf32>
    %72 = vector.multi_reduction <add>, %69, %cst_80 [0] : vector<64x128xf32> to vector<128xf32>
    %73 = vector.shape_cast %72 : vector<128xf32> to vector<1x128xf32>
    %74 = vector.shape_cast %73 : vector<1x128xf32> to vector<1x1x128xf32>
    %c0_81 = arith.constant 0 : index
    %c0_82 = arith.constant 0 : index
    %c0_83 = arith.constant 0 : index
    %75 = vector.load %arg4[%c0_81, %c0_82, %c0_83] : memref<1x2x128xf32, #tpu.memory_space<vmem>>, vector<1x1x128xf32>
    tpu.vector_store %arg4[%c0_81, %c0_82, %c0_83], %74 {strides = array<i32>} : memref<1x2x128xf32, #tpu.memory_space<vmem>>, vector<1x1x128xf32>,
    %76 = arith.mulf %69, %69 : vector<64x128xf32>
    %cst_84 = arith.constant dense<0.000000e+00> : vector<128xf32>
    %77 = vector.multi_reduction <add>, %76, %cst_84 [0] : vector<64x128xf32> to vector<128xf32>
    %78 = vector.shape_cast %77 : vector<128xf32> to vector<1x128xf32>
    %79 = vector.shape_cast %78 : vector<1x128xf32> to vector<1x1x128xf32>
    %c0_85 = arith.constant 0 : index
    %c1_86 = arith.constant 1 : index
    %c0_87 = arith.constant 0 : index
    %80 = vector.load %arg4[%c0_85, %c1_86, %c0_87] : memref<1x2x128xf32, #tpu.memory_space<vmem>>, vector<1x1x128xf32>
    tpu.vector_store %arg4[%c0_85, %c1_86, %c0_87], %79 {strides = array<i32>} : memref<1x2x128xf32, #tpu.memory_space<vmem>>, vector<1x1x128xf32>,
    return
  }
  func.func @transform_0(%arg0: i32) -> (i32, i32, i32, i32, i32) {
    %c0_i32 = arith.constant 0 : i32
    %c0_i32_0 = arith.constant 0 : i32
    %c0_i32_1 = arith.constant 0 : i32
    %c0_i32_2 = arith.constant 0 : i32
    %c0_i32_3 = arith.constant 0 : i32
    return %arg0, %c0_i32, %c0_i32_0, %c0_i32_1, %c0_i32_2 : i32, i32, i32, i32, i32
  }
  func.func @transform_1(%arg0: i32) -> (i32, i32, i32) {
    %c0_i32 = arith.constant 0 : i32
    %c0_i32_0 = arith.constant 0 : i32
    %c0_i32_1 = arith.constant 0 : i32
    %c0_i32_2 = arith.constant 0 : i32
    return %c0_i32, %c0_i32_0, %c0_i32_1 : i32, i32, i32
  }
  func.func @transform_2(%arg0: i32) -> (i32, i32, i32) {
    %c0_i32 = arith.constant 0 : i32
    %c0_i32_0 = arith.constant 0 : i32
    %c0_i32_1 = arith.constant 0 : i32
    return %arg0, %c0_i32, %c0_i32_0 : i32, i32, i32
  }
  func.func @transform_3(%arg0: i32) -> (i32, i32, i32) {
    %c0_i32 = arith.constant 0 : i32
    %c0_i32_0 = arith.constant 0 : i32
    %c0_i32_1 = arith.constant 0 : i32
    return %arg0, %c0_i32, %c0_i32_0 : i32, i32, i32
  }
}

</mosaic_0001>

<llo_original>
// kernel: tpu_custom_call.1
$region0: #{tpu_custom_call.1}
  #allocation0 [shape = 'u32[]', space=smem, size = 0x4, offset = 0x4, fixed_abs, tag = 'smem constant byte address 0x4 - core index']
  #allocation1 [shape = 'u32[144,128]{1,0:T(1,128)}', space=vmem, size = 0x12000, scoped, tag = 'internal scratch']
  #allocation2 [shape = 'bf16[1,10,10,4]{3,2,1,0:T(8,128)(2,1)}', space=vmem, size = 0xa000, scoped, tag = 'scratch operand']
  %s0 = inlined_call_operand.hbm [shape: f32[2,8,2,8,8], index: 0, kind: input, shape index: {}]
  %s1 = inlined_call_operand.hbm [shape: bf16[9,4,128], index: 1, kind: input, shape index: {}]
  %s2 = inlined_call_operand.hbm [shape: f32[2,64,128], index: 2, kind: output, shape index: {0}]
  %s3 = inlined_call_operand.hbm [shape: f32[2,2,128], index: 3, kind: output, shape index: {1}]
  %4 = xla_tuple %s2, %s3
  %s5 = sld [smem:[#allocation0]]
  $region57: #{tpu_custom_call.1} parent=0
    _
  %s7 = ssub.s32 1, %s5
  %s8 = scalar_select 0, %s7, %s5
  $region1: #{tpu_custom_call.1} parent=0
    #allocation3 [shape = 'u8[131072]{0}', space=vmem, size = 0x20000, scoped, tag = 'input window, operand 0']
    #allocation4 [shape = 's32[2]{0}', space=sflag, size = 0x8, scoped, tag = 'scoped memory for tpu_custom_call.1']
    #allocation5 [shape = 's32[2]{0}', space=sflag, size = 0x8, scoped, tag = 'scoped memory for tpu_custom_call.1']
    #allocation6 [shape = 'u8[9216]{0}', space=vmem, size = 0x2400, scoped, tag = 'input window, operand 1, single buffered']
    #allocation7 [shape = 's32[1]{0}', space=sflag, size = 0x4, scoped, tag = 'scoped memory for tpu_custom_call.1']
    #allocation8 [shape = 'u8[65536]{0}', space=vmem, size = 0x10000, scoped, tag = 'output window, operand 0']
    #allocation9 [shape = 'u8[2048]{0}', space=vmem, size = 0x800, scoped, tag = 'output window, operand 1']
    #allocation10 [shape = 's32[2]{0}', space=sflag, size = 0x8, scoped, tag = 'scoped memory for tpu_custom_call.1']
    %9 = vsyncpa [#allocation4], 0
    %s10 = scalar_lea.sflag [#allocation4], 1
    %11 = vsyncpa %s10, 0
    %12 = vsyncpa [#allocation7], 0
    %13 = vsyncpa [#allocation5], 0
    %s14 = scalar_lea.sflag [#allocation5], 1
    %15 = vsyncpa %s14, 0
    %16 = vsyncpa [#allocation10], 0
    %s17 = scalar_lea.sflag [#allocation10], 1
    %18 = vsyncpa %s17, 0
    loop: start=0, step=1, limit=4
    $region2: #{tpu_custom_call.1} parent=1 // loop_pre_header
      _
    $region3: #{tpu_custom_call.1} parent=1 // loop_header
      %s20 = sphi 0, %s24
      %p21 = scmp.ge.s32.totalorder %s20, 4
      %s30 = sphi 0, %s32
      %s33 = sphi 0, %s30
      %s34 = sphi 0, %s33
      %s50 = sphi 0, %s34
      %s54 = sphi 0, %s54
      %s56 = sphi 0, %s54
      %s57 = sphi 0, %s56
      %s71 = sphi 0, %s57
      %s77 = sphi 0, %s79
      %s80 = sphi 0, %s77
      %s81 = sphi 0, %s80
      %s97 = sphi 0, %s81
      %s103 = sphi 0, %s105
      %s106 = sphi 0, %s103
      %s107 = sphi 0, %s106
      %s123 = sphi 0, %s107
    $region4: #{tpu_custom_call.1} parent=1 // loop_header_branch
      %23 = sbr.rel (%p21) target = $region8
    $region5: #{tpu_custom_call.1} parent=1 // loop_body
      %s25 = ssub.s32 %s20, 1
      %s26 = ssub.s32 %s20, 2
      %s27 = sadd.s32 %s20, 1
      %s28 = ssub.s32 %s20, %s27
      %p29 = scmp.eq.s32.totalorder %s28, 0
      %s31 = sadd.s32 %s30, 1
      %s32 = scalar_select %p29, %s30, %s31
      %p35 = pneg %p29
      %p36 = scmp.eq.s32.totalorder %s20, 1
      %p37 = por %p35, %p36
      %p38 = scmp.ne.s32.totalorder %s30, %s33
      %p39 = scmp.eq.s32.totalorder %s20, 0
      %p40 = por %p38, %p39
      %p41 = scmp.ne.s32.totalorder %s30, %s33
      %p42 = scmp.eq.s32.totalorder %s25, 1
      %p43 = por %p41, %p42
      %p44 = scmp.ne.s32.totalorder %s33, %s34
      %p45 = scmp.eq.s32.totalorder %s25, 0
      %p46 = por %p44, %p45
      %p47 = scmp.ne.s32.totalorder %s33, %s34
      %p48 = scmp.eq.s32.totalorder %s26, 1
      %p49 = por %p47, %p48
      %p51 = scmp.ne.s32.totalorder %s34, %s50
      %p52 = scmp.eq.s32.totalorder %s26, 0
      %p53 = por %p51, %p52
      %s55 = sadd.s32 %s54, 1
      %p58 = scmp.eq.s32.totalorder %s20, 1
      %p59 = scmp.ne.s32.totalorder %s54, %s56
      %p60 = scmp.eq.s32.totalorder %s20, 0
      %p61 = por %p59, %p60
      %p62 = scmp.ne.s32.totalorder %s54, %s56
      %p63 = scmp.eq.s32.totalorder %s25, 1
      %p64 = por %p62, %p63
      %p65 = scmp.ne.s32.totalorder %s56, %s57
      %p66 = scmp.eq.s32.totalorder %s25, 0
      %p67 = por %p65, %p66
      %p68 = scmp.ne.s32.totalorder %s56, %s57
      %p69 = scmp.eq.s32.totalorder %s26, 1
      %p70 = por %p68, %p69
      %p72 = scmp.ne.s32.totalorder %s57, %s71
      %p73 = scmp.eq.s32.totalorder %s26, 0
      %p74 = por %p72, %p73
      %s75 = ssub.s32 %s20, %s27
      %p76 = scmp.eq.s32.totalorder %s75, 0
      %s78 = sadd.s32 %s77, 1
      %s79 = scalar_select %p76, %s77, %s78
      %p82 = pneg %p76
      %p83 = scmp.eq.s32.totalorder %s20, 1
      %p84 = por %p82, %p83
      %p85 = scmp.ne.s32.totalorder %s77, %s80
      %p86 = scmp.eq.s32.totalorder %s20, 0
      %p87 = por %p85, %p86
      %p88 = scmp.ne.s32.totalorder %s77, %s80
      %p89 = scmp.eq.s32.totalorder %s25, 1
      %p90 = por %p88, %p89
      %p91 = scmp.ne.s32.totalorder %s80, %s81
      %p92 = scmp.eq.s32.totalorder %s25, 0
      %p93 = por %p91, %p92
      %p94 = scmp.ne.s32.totalorder %s80, %s81
      %p95 = scmp.eq.s32.totalorder %s26, 1
      %p96 = por %p94, %p95
      %p98 = scmp.ne.s32.totalorder %s81, %s97
      %p99 = scmp.eq.s32.totalorder %s26, 0
      %p100 = por %p98, %p99
      %s101 = ssub.s32 %s20, %s27
      %p102 = scmp.eq.s32.totalorder %s101, 0
      %s104 = sadd.s32 %s103, 1
      %s105 = scalar_select %p102, %s103, %s104
      %p108 = pneg %p102
      %p109 = scmp.eq.s32.totalorder %s20, 1
      %p110 = por %p108, %p109
      %p111 = scmp.ne.s32.totalorder %s103, %s106
      %p112 = scmp.eq.s32.totalorder %s20, 0
      %p113 = por %p111, %p112
      %p114 = scmp.ne.s32.totalorder %s103, %s106
      %p115 = scmp.eq.s32.totalorder %s25, 1
      %p116 = por %p114, %p115
      %p117 = scmp.ne.s32.totalorder %s106, %s107
      %p118 = scmp.eq.s32.totalorder %s25, 0
      %p119 = por %p117, %p118
      %p120 = scmp.ne.s32.totalorder %s106, %s107
      %p121 = scmp.eq.s32.totalorder %s26, 1
      %p122 = por %p120, %p121
      %p124 = scmp.ne.s32.totalorder %s107, %s123
      %p125 = scmp.eq.s32.totalorder %s26, 0
      %p126 = por %p124, %p125
      %p127 = scmp.le.s32.totalorder 1, %s20
      %p128 = scmp.lt.s32.totalorder %s20, 3
      %p129 = pnand %p127, %p128
      %p130 = pneg %p129
      // Predicated region
      $region9: #{tpu_custom_call.1} parent=5 // pred_check
        _
      $region10: #{tpu_custom_call.1} parent=5 // pred_check_branch
        %132 = sbr.rel (%p129) target = $region12
      $region11: #{tpu_custom_call.1} parent=5 // pred_region
        %s133 = ssub.s32 %s20, 1
        // Predicated region
        $region13: #{tpu_custom_call.1} parent=11 // pred_check
          %p134 = pneg %p67
        $region14: #{tpu_custom_call.1} parent=11 // pred_check_branch
          %136 = sbr.rel (%p134) target = $region16
        $region15: #{tpu_custom_call.1} parent=11 // pred_region
          %s138 = ssub.s32 288, 288
          %139 = vsyncadd [#allocation7], %s138
          %s140 = sshll.u32 [#allocation6], 4
          %s141 = int_to_ptr.vmem [resolvable:$true] %s140
          %146 = dma.hbm_to_vmem [thread:$0]  %s1, 288, %s141, [#allocation7], 32, 32, 2
        $region16: #{tpu_custom_call.1} parent=11 // pred_fallthru
          _
      $region12: #{tpu_custom_call.1} parent=5 // pred_fallthru
        _
      %p147 = scmp.lt.s32.totalorder %s20, 2
      // Predicated region
      $region17: #{tpu_custom_call.1} parent=5 // pred_check
        %p148 = pneg %p147
      $region18: #{tpu_custom_call.1} parent=5 // pred_check_branch
        %150 = sbr.rel (%p148) target = $region20
      $region19: #{tpu_custom_call.1} parent=5 // pred_region
        // Predicated region
        $region21: #{tpu_custom_call.1} parent=19 // pred_check
          %p151 = pneg %p40
        $region22: #{tpu_custom_call.1} parent=19 // pred_check_branch
          %153 = sbr.rel (%p151) target = $region24
        $region23: #{tpu_custom_call.1} parent=19 // pred_region
          %s154 = sand.u32 %s30, 1
          %s155 = scalar_lea.sflag [#allocation4], %s154
          %s156 = sand.u32 %s30, 1
          %s157 = smul.addr %s156, 128
          %s158 = scalar_lea.vmem [#allocation3], %s157
          %s160 = ssub.s32 2048, 2048
          %161 = vsyncadd %s155, %s160
          %s162 = smul.addr %s20, 16
          %s163 = smul.addr %s162, 128
          %s164 = scalar_lea.hbm %s0, %s163
          %s165 = sshll.u32 %s158, 4
          %s166 = int_to_ptr.vmem [resolvable:$true] %s165
          %171 = dma.hbm_to_vmem [thread:$0]  %s164, 2048, %s166, %s155, 128, 128, 8
        $region24: #{tpu_custom_call.1} parent=19 // pred_fallthru
          _
      $region20: #{tpu_custom_call.1} parent=5 // pred_fallthru
        _
      %p172 = scmp.le.s32.totalorder 1, %s20
      %p173 = scmp.lt.s32.totalorder %s20, 3
      %p174 = pnand %p172, %p173
      %p175 = pneg %p174
      // Predicated region
      $region25: #{tpu_custom_call.1} parent=5 // pred_check
        _
      $region26: #{tpu_custom_call.1} parent=5 // pred_check_branch
        %177 = sbr.rel (%p174) target = $region28
      $region27: #{tpu_custom_call.1} parent=5 // pred_region
        %s178 = ssub.s32 %s20, 1
        %s179 = sand.u32 %s33, 1
        %s180 = scalar_lea.sflag [#allocation4], %s179
        %s181 = sand.u32 %s33, 1
        %s182 = smul.addr %s181, 128
        %s183 = scalar_lea.vmem [#allocation3], %s182
        // Predicated region
        $region29: #{tpu_custom_call.1} parent=27 // pred_check
          %p184 = pneg %p46
        $region30: #{tpu_custom_call.1} parent=27 // pred_check_branch
          %186 = sbr.rel (%p184) target = $region32
        $region31: #{tpu_custom_call.1} parent=27 // pred_region
          %187 = dma.done %s180, 2048
        $region32: #{tpu_custom_call.1} parent=27 // pred_fallthru
          _
        // Predicated region
        $region33: #{tpu_custom_call.1} parent=27 // pred_check
          %p188 = pneg %p67
        $region34: #{tpu_custom_call.1} parent=27 // pred_check_branch
          %190 = sbr.rel (%p188) target = $region36
        $region35: #{tpu_custom_call.1} parent=27 // pred_region
          %191 = dma.done [#allocation7], 288
        $region36: #{tpu_custom_call.1} parent=27 // pred_fallthru
          _
        %s192 = sand.u32 %s33, 1
        %s193 = scalar_lea.sflag [#allocation4], %s192
        %s194 = sand.u32 %s33, 1
        %s195 = smul.addr %s194, 128
        %s196 = scalar_lea.vmem [#allocation3], %s195
        %p197 = pneg %p46
        %p198 = pneg %p43
        %p199 = pneg %p67
        %p200 = pneg %p64
        %p201 = pneg %p93
        %p202 = pneg %p90
        %s203 = sand.u32 %s80, 1
        %s204 = scalar_lea.sflag [#allocation5], %s203
        %s205 = sand.u32 %s80, 1
        %s206 = smul.addr %s205, 64
        %s207 = scalar_lea.vmem [#allocation8], %s206
        %p208 = pneg %p119
        %p209 = pneg %p116
        %s210 = sand.u32 %s106, 1
        %s211 = scalar_lea.sflag [#allocation10], %s210
        %s212 = sand.u32 %s106, 1
        %s213 = smul.addr %s212, 2
        %s214 = scalar_lea.vmem [#allocation9], %s213
        %v216 = vld [vmem:[%s183] sm:$0xff]
        %v217 = vld [vmem:[%s183 + $0x8] sm:$0xff]
        %v218 = vld [vmem:[%s183 + $0x10] sm:$0xff]
        %v219 = vld [vmem:[%s183 + $0x18] sm:$0xff]
        %v220 = vld [vmem:[%s183 + $0x20] sm:$0xff]
        %v221 = vld [vmem:[%s183 + $0x28] sm:$0xff]
        %v222 = vld [vmem:[%s183 + $0x30] sm:$0xff]
        %v223 = vld [vmem:[%s183 + $0x38] sm:$0xff]
        %v224 = vld [vmem:[%s183 + $0x40] sm:$0xff]
        %v225 = vld [vmem:[%s183 + $0x48] sm:$0xff]
        %v226 = vld [vmem:[%s183 + $0x50] sm:$0xff]
        %v227 = vld [vmem:[%s183 + $0x58] sm:$0xff]
        %v228 = vld [vmem:[%s183 + $0x60] sm:$0xff]
        %v229 = vld [vmem:[%s183 + $0x68] sm:$0xff]
        %v230 = vld [vmem:[%s183 + $0x70] sm:$0xff]
        %v231 = vld [vmem:[%s183 + $0x78] sm:$0xff]
        %v232 = vmax.f32 %v216, %v217
        %v233 = vmax.f32 %v218, %v219
        %v234 = vmax.f32 %v220, %v221
        %v235 = vmax.f32 %v222, %v223
        %v236 = vmax.f32 %v224, %v225
        %v237 = vmax.f32 %v226, %v227
        %v238 = vmax.f32 %v228, %v229
        %v239 = vmax.f32 %v230, %v231
        %248 = vrot.lane.b32.xlu0 %v232, 124
        %v249 = vpop.permute.xlu0 %248
        %250 = vrot.lane.b32.xlu0 %v233, 124
        %v251 = vpop.permute.xlu0 %250
        %252 = vrot.lane.b32.xlu0 %v234, 124
        %v253 = vpop.permute.xlu0 %252
        %254 = vrot.lane.b32.xlu0 %v235, 124
        %v255 = vpop.permute.xlu0 %254
        %256 = vrot.lane.b32.xlu0 %v236, 124
        %v257 = vpop.permute.xlu0 %256
        %258 = vrot.lane.b32.xlu0 %v237, 124
        %v259 = vpop.permute.xlu0 %258
        %260 = vrot.lane.b32.xlu0 %v238, 124
        %v261 = vpop.permute.xlu0 %260
        %262 = vrot.lane.b32.xlu0 %v239, 124
        %v263 = vpop.permute.xlu0 %262
        %v272 = vmax.f32 %v232, %v249
        %v273 = vmax.f32 %v233, %v251
        %v274 = vmax.f32 %v234, %v253
        %v275 = vmax.f32 %v235, %v255
        %v276 = vmax.f32 %v236, %v257
        %v277 = vmax.f32 %v237, %v259
        %v278 = vmax.f32 %v238, %v261
        %v279 = vmax.f32 %v239, %v263
        %vm280 = vcmask 27648
        %281 = vst.msk [vmem:[#allocation2] sm:$0xf] %vm280, 0
        %vm282 = vcmask 24576
        %283 = vst.msk [vmem:[#allocation2 + $0x4] sm:$0x1] %vm282, 0
        %284 = vst.msk [vmem:[#allocation2 + $0x8] sm:$0xf] %vm280, 0
        %285 = vst.msk [vmem:[#allocation2 + $0xc] sm:$0x1] %vm282, 0
        %286 = vst.msk [vmem:[#allocation2 + $0x10] sm:$0xf] %vm280, 0
        %287 = vst.msk [vmem:[#allocation2 + $0x14] sm:$0x1] %vm282, 0
        %288 = vst.msk [vmem:[#allocation2 + $0x18] sm:$0xf] %vm280, 0
        %289 = vst.msk [vmem:[#allocation2 + $0x1c] sm:$0x1] %vm282, 0
        %290 = vst.msk [vmem:[#allocation2 + $0x20] sm:$0xf] %vm280, 0
        %291 = vst.msk [vmem:[#allocation2 + $0x24] sm:$0x1] %vm282, 0
        %292 = vst.msk [vmem:[#allocation2 + $0x28] sm:$0xf] %vm280, 0
        %293 = vst.msk [vmem:[#allocation2 + $0x2c] sm:$0x1] %vm282, 0
        %294 = vst.msk [vmem:[#allocation2 + $0x30] sm:$0xf] %vm280, 0
        %295 = vst.msk [vmem:[#allocation2 + $0x34] sm:$0x1] %vm282, 0
        %296 = vst.msk [vmem:[#allocation2 + $0x38] sm:$0xf] %vm280, 0
        %297 = vst.msk [vmem:[#allocation2 + $0x3c] sm:$0x1] %vm282, 0
        %298 = vst.msk [vmem:[#allocation2 + $0x40] sm:$0xf] %vm280, 0
        %299 = vst.msk [vmem:[#allocation2 + $0x44] sm:$0x1] %vm282, 0
        %300 = vst.msk [vmem:[#allocation2 + $0x48] sm:$0xf] %vm280, 0
        %301 = vst.msk [vmem:[#allocation2 + $0x4c] sm:$0x1] %vm282, 0
        %v302 = vpack.c.bf16 %v272, %v272
        %v303 = vpack.c.bf16 %v273, %v273
        %v304 = vpack.c.bf16 %v274, %v274
        %v305 = vpack.c.bf16 %v275, %v275
        %v306 = vpack.c.bf16 %v276, %v276
        %v307 = vpack.c.bf16 %v277, %v277
        %v308 = vpack.c.bf16 %v278, %v278
        %v309 = vpack.c.bf16 %v279, %v279
        %v318 = vunpack.c.l.b16 %v302
        %v319 = vunpack.c.l.b16 %v303
        %v320 = vunpack.c.l.b16 %v304
        %v321 = vunpack.c.l.b16 %v305
        %v322 = vunpack.c.l.b16 %v306
        %v323 = vunpack.c.l.b16 %v307
        %v324 = vunpack.c.l.b16 %v308
        %v325 = vunpack.c.l.b16 %v309
        %v326 = vpack.c.b16 %v318, %v318
        %v327 = vpack.c.b16 %v319, %v319
        %v328 = vpack.c.b16 %v320, %v320
        %v329 = vpack.c.b16 %v321, %v321
        %v330 = vpack.c.b16 %v322, %v322
        %v331 = vpack.c.b16 %v323, %v323
        %v332 = vpack.c.b16 %v324, %v324
        %v333 = vpack.c.b16 %v325, %v325
        %v335 = vshrl.u32 %v326, 16
        %v337 = vrot.slane %v335, 7
        %v338 = vshll.u32 %v326, 16
        %v340 = vor.u32 %v337, %v338
        %v341 = vrot.slane %v337, 4
        %v343 = vshrl.u32 %v327, 16
        %v345 = vrot.slane %v343, 7
        %v346 = vshll.u32 %v327, 16
        %v348 = vor.u32 %v345, %v346
        %v349 = vrot.slane %v345, 4
        %v351 = vshrl.u32 %v328, 16
        %v353 = vrot.slane %v351, 7
        %v354 = vshll.u32 %v328, 16
        %v356 = vor.u32 %v353, %v354
        %v357 = vrot.slane %v353, 4
        %v359 = vshrl.u32 %v329, 16
        %v361 = vrot.slane %v359, 7
        %v362 = vshll.u32 %v329, 16
        %v364 = vor.u32 %v361, %v362
        %v365 = vrot.slane %v361, 4
        %v367 = vshrl.u32 %v330, 16
        %v369 = vrot.slane %v367, 7
        %v370 = vshll.u32 %v330, 16
        %v372 = vor.u32 %v369, %v370
        %v373 = vrot.slane %v369, 4
        %v375 = vshrl.u32 %v331, 16
        %v377 = vrot.slane %v375, 7
        %v378 = vshll.u32 %v331, 16
        %v380 = vor.u32 %v377, %v378
        %v381 = vrot.slane %v377, 4
        %v383 = vshrl.u32 %v332, 16
        %v385 = vrot.slane %v383, 7
        %v386 = vshll.u32 %v332, 16
        %v388 = vor.u32 %v385, %v386
        %v389 = vrot.slane %v385, 4
        %v391 = vshrl.u32 %v333, 16
        %v393 = vrot.slane %v391, 7
        %v394 = vshll.u32 %v333, 16
        %v396 = vor.u32 %v393, %v394
        %v397 = vrot.slane %v393, 4
        %s414 = scalar_lea.vmem [#allocation2], 8
        %vm415 = vcmask 27648
        %vm416 = vsmask.f32 7938
        %vm417 = vmand %vm415, %vm416
        %v418 = vld [vmem:[%s414] sm:$0xf]
        %v419 = vsel %vm417, %v340, %v418
        %420 = vst [vmem:[%s414] sm:$0xf] %v419
        %vm421 = vcmask 24576
        %vm422 = vsmask.f32 256
        %vm423 = vmand %vm421, %vm422
        %v424 = vld [vmem:[%s414 + $0x4] sm:$0x1]
        %v425 = vsel %vm423, %v341, %v424
        %426 = vst [vmem:[%s414 + $0x4] sm:$0x1] %v425
        %v427 = vld [vmem:[%s414 + $0x8] sm:$0xf]
        %v428 = vsel %vm417, %v348, %v427
        %429 = vst [vmem:[%s414 + $0x8] sm:$0xf] %v428
        %v430 = vld [vmem:[%s414 + $0xc] sm:$0x1]
        %v431 = vsel %vm423, %v349, %v430
        %432 = vst [vmem:[%s414 + $0xc] sm:$0x1] %v431
        %v433 = vld [vmem:[%s414 + $0x10] sm:$0xf]
        %v434 = vsel %vm417, %v356, %v433
        %435 = vst [vmem:[%s414 + $0x10] sm:$0xf] %v434
        %v436 = vld [vmem:[%s414 + $0x14] sm:$0x1]
        %v437 = vsel %vm423, %v357, %v436
        %438 = vst [vmem:[%s414 + $0x14] sm:$0x1] %v437
        %v439 = vld [vmem:[%s414 + $0x18] sm:$0xf]
        %v440 = vsel %vm417, %v364, %v439
        %441 = vst [vmem:[%s414 + $0x18] sm:$0xf] %v440
        %v442 = vld [vmem:[%s414 + $0x1c] sm:$0x1]
        %v443 = vsel %vm423, %v365, %v442
        %444 = vst [vmem:[%s414 + $0x1c] sm:$0x1] %v443
        %v445 = vld [vmem:[%s414 + $0x20] sm:$0xf]
        %v446 = vsel %vm417, %v372, %v445
        %447 = vst [vmem:[%s414 + $0x20] sm:$0xf] %v446
        %v448 = vld [vmem:[%s414 + $0x24] sm:$0x1]
        %v449 = vsel %vm423, %v373, %v448
        %450 = vst [vmem:[%s414 + $0x24] sm:$0x1] %v449
        %v451 = vld [vmem:[%s414 + $0x28] sm:$0xf]
        %v452 = vsel %vm417, %v380, %v451
        %453 = vst [vmem:[%s414 + $0x28] sm:$0xf] %v452
        %v454 = vld [vmem:[%s414 + $0x2c] sm:$0x1]
        %v455 = vsel %vm423, %v381, %v454
        %456 = vst [vmem:[%s414 + $0x2c] sm:$0x1] %v455
        %v457 = vld [vmem:[%s414 + $0x30] sm:$0xf]
        %v458 = vsel %vm417, %v388, %v457
        %459 = vst [vmem:[%s414 + $0x30] sm:$0xf] %v458
        %v460 = vld [vmem:[%s414 + $0x34] sm:$0x1]
        %v461 = vsel %vm423, %v389, %v460
        %462 = vst [vmem:[%s414 + $0x34] sm:$0x1] %v461
        %v463 = vld [vmem:[%s414 + $0x38] sm:$0xf]
        %v464 = vsel %vm417, %v396, %v463
        %465 = vst [vmem:[%s414 + $0x38] sm:$0xf] %v464
        %v466 = vld [vmem:[%s414 + $0x3c] sm:$0x1]
        %v467 = vsel %vm423, %v397, %v466
        %468 = vst [vmem:[%s414 + $0x3c] sm:$0x1] %v467
        %v469 = vld [vmem:[#allocation2] sm:$0xf]
        %v470 = vld [vmem:[#allocation2 + $0x8] sm:$0xf]
        %v471 = vld [vmem:[#allocation2 + $0x10] sm:$0xf]
        %v472 = vld [vmem:[#allocation2 + $0x18] sm:$0xf]
        %v473 = vld [vmem:[#allocation2 + $0x20] sm:$0xf]
        %v474 = vld [vmem:[#allocation2 + $0x28] sm:$0xf]
        %v475 = vld [vmem:[#allocation2 + $0x30] sm:$0xf]
        %v476 = vld [vmem:[#allocation2 + $0x38] sm:$0xf]
        %v477 = vld [vmem:[#allocation6] sm:$0x3]
        %v478 = vld [vmem:[#allocation2 + $0x4] sm:$0x1]
        %v479 = vld [vmem:[#allocation2 + $0xc] sm:$0x1]
        %v480 = vld [vmem:[#allocation2 + $0x14] sm:$0x1]
        %v481 = vld [vmem:[#allocation2 + $0x1c] sm:$0x1]
        %v482 = vld [vmem:[#allocation2 + $0x24] sm:$0x1]
        %v483 = vld [vmem:[#allocation2 + $0x2c] sm:$0x1]
        %v484 = vld [vmem:[#allocation2 + $0x34] sm:$0x1]
        %v485 = vld [vmem:[#allocation2 + $0x3c] sm:$0x1]
        %vm486 = vsmask.f32 3328
        %vm487 = vsmask.f32 7440
        %vm488 = vmor %vm486, %vm487
        %v490 = vshrl.u32 %v469, 16
        %v492 = vrot.slane %v490, 4
        %v493 = vshll.u32 %v469, 16
        %v495 = vrot.slane %v493, 5
        %v496 = vor.u32 %v492, %v495
        %v497 = vrot.slane %v496, 4
        %v499 = vshll.u32 %v478, 16
        %v501 = vrot.slane %v499, 5
        %v502 = vsel %vm488, %v497, %v501
        %v504 = vshrl.u32 %v470, 16
        %v506 = vrot.slane %v504, 4
        %v507 = vshll.u32 %v470, 16
        %v509 = vrot.slane %v507, 5
        %v510 = vor.u32 %v506, %v509
        %v511 = vrot.slane %v510, 4
        %v513 = vshll.u32 %v479, 16
        %v515 = vrot.slane %v513, 5
        %v516 = vsel %vm488, %v511, %v515
        %v518 = vshrl.u32 %v471, 16
        %v520 = vrot.slane %v518, 4
        %v521 = vshll.u32 %v471, 16
        %v523 = vrot.slane %v521, 5
        %v524 = vor.u32 %v520, %v523
        %v525 = vrot.slane %v524, 4
        %v527 = vshll.u32 %v480, 16
        %v529 = vrot.slane %v527, 5
        %v530 = vsel %vm488, %v525, %v529
        %v532 = vshrl.u32 %v472, 16
        %v534 = vrot.slane %v532, 4
        %v535 = vshll.u32 %v472, 16
        %v537 = vrot.slane %v535, 5
        %v538 = vor.u32 %v534, %v537
        %v539 = vrot.slane %v538, 4
        %v541 = vshll.u32 %v481, 16
        %v543 = vrot.slane %v541, 5
        %v544 = vsel %vm488, %v539, %v543
        %v546 = vshrl.u32 %v473, 16
        %v548 = vrot.slane %v546, 4
        %v549 = vshll.u32 %v473, 16
        %v551 = vrot.slane %v549, 5
        %v552 = vor.u32 %v548, %v551
        %v553 = vrot.slane %v552, 4
        %v555 = vshll.u32 %v482, 16
        %v557 = vrot.slane %v555, 5
        %v558 = vsel %vm488, %v553, %v557
        %v560 = vshrl.u32 %v474, 16
        %v562 = vrot.slane %v560, 4
        %v563 = vshll.u32 %v474, 16
        %v565 = vrot.slane %v563, 5
        %v566 = vor.u32 %v562, %v565
        %v567 = vrot.slane %v566, 4
        %v569 = vshll.u32 %v483, 16
        %v571 = vrot.slane %v569, 5
        %v572 = vsel %vm488, %v567, %v571
        %v574 = vshrl.u32 %v475, 16
        %v576 = vrot.slane %v574, 4
        %v577 = vshll.u32 %v475, 16
        %v579 = vrot.slane %v577, 5
        %v580 = vor.u32 %v576, %v579
        %v581 = vrot.slane %v580, 4
        %v583 = vshll.u32 %v484, 16
        %v585 = vrot.slane %v583, 5
        %v586 = vsel %vm488, %v581, %v585
        %v588 = vshrl.u32 %v476, 16
        %v590 = vrot.slane %v588, 4
        %v591 = vshll.u32 %v476, 16
        %v593 = vrot.slane %v591, 5
        %v594 = vor.u32 %v590, %v593
        %v595 = vrot.slane %v594, 4
        %v597 = vshll.u32 %v485, 16
        %v599 = vrot.slane %v597, 5
        %v600 = vsel %vm488, %v595, %v599
        %s601 = scalar_lea.vmem [#allocation6], 2
        %v602 = vld [vmem:[%s601] sm:$0x3]
        %v603 = vunpack.c.l.b16 %v502
        %v604 = vunpack.c.l.b16 %v516
        %v605 = vunpack.c.l.b16 %v530
        %v606 = vunpack.c.l.b16 %v544
        %v607 = vunpack.c.l.b16 %v558
        %v608 = vunpack.c.l.b16 %v572
        %v609 = vunpack.c.l.b16 %v586
        %v610 = vunpack.c.l.b16 %v600
        %v611 = vpack.c.b16 %v604, %v603
        %v612 = vpack.c.b16 %v606, %v605
        %v613 = vpack.c.b16 %v608, %v607
        %v614 = vpack.c.b16 %v610, %v609
        %vm615 = vcmask 31744
        %v617 = vsel %vm615, %v611, 0
        %v620 = vsel %vm615, %v612, 0
        %v623 = vsel %vm615, %v613, 0
        %v626 = vsel %vm615, %v614, 0
        %vm628 = vcmask 1041408
        %v630 = vsel %vm628, %v602, 0
        %632 = vmatprep.subr.bf16.mxu0 0
        %633 = vmatpush1.bf16.msra.mxu0 %v630
        %634 = vmatprep.subr.bf16.mxu0 0
        %635 = vmatpush1.bf16.msra.mxu0 0
        %636 = vmatprep.subr.bf16.mxu0 0
        %637 = vmatpush1.bf16.msra.mxu0 0
        %638 = vmatprep.subr.bf16.mxu0 0
        %639 = vmatpush1.bf16.msra.mxu0 0
        %640 = vmatprep.subr.bf16.mxu0 0
        %641 = vmatpush1.bf16.msra.mxu0 0
        %642 = vmatprep.subr.bf16.mxu0 0
        %643 = vmatpush1.bf16.msra.mxu0 0
        %644 = vmatprep.subr.bf16.mxu0 0
        %645 = vmatpush1.bf16.msra.mxu0 0
        %646 = vmatprep.subr.bf16.mxu0 0
        %647 = vmatpush1.bf16.msra.mxu0 0
        %648 = vmatprep.subr.bf16.mxu0 0
        %649 = vmatpush1.bf16.msra.mxu0 0
        %650 = vmatprep.subr.bf16.mxu0 0
        %651 = vmatpush1.bf16.msra.mxu0 0
        %652 = vmatprep.subr.bf16.mxu0 0
        %653 = vmatpush1.bf16.msra.mxu0 0
        %654 = vmatprep.subr.bf16.mxu0 0
        %655 = vmatpush1.bf16.msra.mxu0 0
        %656 = vmatprep.subr.bf16.mxu0 0
        %657 = vmatpush1.bf16.msra.mxu0 0
        %658 = vmatprep.subr.bf16.mxu0 0
        %659 = vmatpush1.bf16.msra.mxu0 0
        %660 = vmatprep.subr.bf16.mxu0 0
        %661 = vmatpush1.bf16.msra.mxu0 0
        %662 = vmatprep.subr.bf16.mxu0 0
        %663 = vmatpush1.bf16.msra.mxu0 0
        %664 = vmatprep.mubr.bf16.mxu0 0
        %665 = vmatmul.mubr.bf16.gmra.mrb[0].mxu0 %v617
        %v666 = vpop.f32.mrb[0].mxu0
        %v667 = vadd.f32 0.0, %v666
        %v668 = vpop.f32.mrb[0].mxu0
        %v669 = vpop.f32.mrb[0].mxu0
        %v670 = vadd.f32 0.0, %v669
        %v671 = vpop.f32.mrb[0].mxu0
        %672 = vmatprep.mubr.bf16.mxu0 0
        %673 = vmatmul.mubr.bf16.gmra.mrb[0].mxu0 %v620
        %v674 = vpop.f32.mrb[0].mxu0
        %v675 = vadd.f32 0.0, %v674
        %v676 = vpop.f32.mrb[0].mxu0
        %v677 = vpop.f32.mrb[0].mxu0
        %v678 = vadd.f32 0.0, %v677
        %v679 = vpop.f32.mrb[0].mxu0
        %680 = vmatprep.mubr.bf16.mxu0 0
        %681 = vmatmul.mubr.bf16.gmra.mrb[0].mxu0 %v623
        %v682 = vpop.f32.mrb[0].mxu0
        %v683 = vadd.f32 0.0, %v682
        %v684 = vpop.f32.mrb[0].mxu0
        %v685 = vpop.f32.mrb[0].mxu0
        %v686 = vadd.f32 0.0, %v685
        %v687 = vpop.f32.mrb[0].mxu0
        %688 = vmatprep.mubr.bf16.mxu0 0
        %689 = vmatmul.mubr.bf16.gmra.mrb[0].mxu0 %v626
        %v690 = vpop.f32.mrb[0].mxu0
        %v691 = vadd.f32 0.0, %v690
        %v692 = vpop.f32.mrb[0].mxu0
        %v693 = vpop.f32.mrb[0].mxu0
        %v694 = vadd.f32 0.0, %v693
        %v695 = vpop.f32.mrb[0].mxu0
        %696 = vdwg.mxu0
        %v705 = vunpack.c.l.b16 %v469
        %v706 = vunpack.c.l.b16 %v470
        %v707 = vunpack.c.l.b16 %v471
        %v708 = vunpack.c.l.b16 %v472
        %v709 = vunpack.c.l.b16 %v473
        %v710 = vunpack.c.l.b16 %v474
        %v711 = vunpack.c.l.b16 %v475
        %v712 = vunpack.c.l.b16 %v476
        %v713 = vpack.c.b16 %v706, %v705
        %v714 = vpack.c.b16 %v708, %v707
        %v715 = vpack.c.b16 %v710, %v709
        %v716 = vpack.c.b16 %v712, %v711
        %v718 = vsel %vm615, %v713, 0
        %v721 = vsel %vm615, %v714, 0
        %v724 = vsel %vm615, %v715, 0
        %v727 = vsel %vm615, %v716, 0
        %v730 = vsel %vm628, %v477, 0
        %732 = vmatprep.subr.bf16.mxu0 0
        %733 = vmatpush1.bf16.msra.mxu0 %v730
        %734 = vmatprep.subr.bf16.mxu0 0
        %735 = vmatpush1.bf16.msra.mxu0 0
        %736 = vmatprep.subr.bf16.mxu0 0
        %737 = vmatpush1.bf16.msra.mxu0 0
        %738 = vmatprep.subr.bf16.mxu0 0
        %739 = vmatpush1.bf16.msra.mxu0 0
        %740 = vmatprep.subr.bf16.mxu0 0
        %741 = vmatpush1.bf16.msra.mxu0 0
        %742 = vmatprep.subr.bf16.mxu0 0
        %743 = vmatpush1.bf16.msra.mxu0 0
        %744 = vmatprep.subr.bf16.mxu0 0
        %745 = vmatpush1.bf16.msra.mxu0 0
        %746 = vmatprep.subr.bf16.mxu0 0
        %747 = vmatpush1.bf16.msra.mxu0 0
        %748 = vmatprep.subr.bf16.mxu0 0
        %749 = vmatpush1.bf16.msra.mxu0 0
        %750 = vmatprep.subr.bf16.mxu0 0
        %751 = vmatpush1.bf16.msra.mxu0 0
        %752 = vmatprep.subr.bf16.mxu0 0
        %753 = vmatpush1.bf16.msra.mxu0 0
        %754 = vmatprep.subr.bf16.mxu0 0
        %755 = vmatpush1.bf16.msra.mxu0 0
        %756 = vmatprep.subr.bf16.mxu0 0
        %757 = vmatpush1.bf16.msra.mxu0 0
        %758 = vmatprep.subr.bf16.mxu0 0
        %759 = vmatpush1.bf16.msra.mxu0 0
        %760 = vmatprep.subr.bf16.mxu0 0
        %761 = vmatpush1.bf16.msra.mxu0 0
        %762 = vmatprep.subr.bf16.mxu0 0
        %763 = vmatpush1.bf16.msra.mxu0 0
        %764 = vmatprep.mubr.bf16.mxu0 0
        %765 = vmatmul.mubr.bf16.gmra.mrb[0].mxu0 %v718
        %v766 = vpop.f32.mrb[0].mxu0
        %v767 = vadd.f32 %v667, %v766
        %v768 = vpop.f32.mrb[0].mxu0
        %v769 = vpop.f32.mrb[0].mxu0
        %v770 = vadd.f32 %v670, %v769
        %v771 = vpop.f32.mrb[0].mxu0
        %772 = vmatprep.mubr.bf16.mxu0 0
        %773 = vmatmul.mubr.bf16.gmra.mrb[0].mxu0 %v721
        %v774 = vpop.f32.mrb[0].mxu0
        %v775 = vadd.f32 %v675, %v774
        %v776 = vpop.f32.mrb[0].mxu0
        %v777 = vpop.f32.mrb[0].mxu0
        %v778 = vadd.f32 %v678, %v777
        %v779 = vpop.f32.mrb[0].mxu0
        %780 = vmatprep.mubr.bf16.mxu0 0
        %781 = vmatmul.mubr.bf16.gmra.mrb[0].mxu0 %v724
        %v782 = vpop.f32.mrb[0].mxu0
        %v783 = vadd.f32 %v683, %v782
        %v784 = vpop.f32.mrb[0].mxu0
        %v785 = vpop.f32.mrb[0].mxu0
        %v786 = vadd.f32 %v686, %v785
        %v787 = vpop.f32.mrb[0].mxu0
        %788 = vmatprep.mubr.bf16.mxu0 0
        %789 = vmatmul.mubr.bf16.gmra.mrb[0].mxu0 %v727
        %v790 = vpop.f32.mrb[0].mxu0
        %v791 = vadd.f32 %v691, %v790
        %v792 = vpop.f32.mrb[0].mxu0
        %v793 = vpop.f32.mrb[0].mxu0
        %v794 = vadd.f32 %v694, %v793
        %v795 = vpop.f32.mrb[0].mxu0
        %796 = vdwg.mxu0
        %v797 = vld [vmem:[#allocation2] sm:$0xe]
        %v798 = vld [vmem:[#allocation2 + $0x8] sm:$0xe]
        %v799 = vld [vmem:[#allocation2 + $0x10] sm:$0xe]
        %v800 = vld [vmem:[#allocation2 + $0x18] sm:$0xe]
        %v801 = vld [vmem:[#allocation2 + $0x20] sm:$0xe]
        %v802 = vld [vmem:[#allocation2 + $0x28] sm:$0xe]
        %v803 = vld [vmem:[#allocation2 + $0x30] sm:$0xe]
        %v804 = vld [vmem:[#allocation2 + $0x38] sm:$0xe]
        %vm821 = vcmask 1042432
        %vm822 = vcmask 1046532
        %vm823 = vmor %vm821, %vm822
        %v824 = vrot.slane %v797, 5
        %v825 = vrot.slane %v824, 4
        %v826 = vrot.slane %v478, 5
        %v827 = vsel %vm823, %v825, %v826
        %v828 = vrot.slane %v798, 5
        %v829 = vrot.slane %v828, 4
        %v830 = vrot.slane %v479, 5
        %v831 = vsel %vm823, %v829, %v830
        %v832 = vrot.slane %v799, 5
        %v833 = vrot.slane %v832, 4
        %v834 = vrot.slane %v480, 5
        %v835 = vsel %vm823, %v833, %v834
        %v836 = vrot.slane %v800, 5
        %v837 = vrot.slane %v836, 4
        %v838 = vrot.slane %v481, 5
        %v839 = vsel %vm823, %v837, %v838
        %v840 = vrot.slane %v801, 5
        %v841 = vrot.slane %v840, 4
        %v842 = vrot.slane %v482, 5
        %v843 = vsel %vm823, %v841, %v842
        %v844 = vrot.slane %v802, 5
        %v845 = vrot.slane %v844, 4
        %v846 = vrot.slane %v483, 5
        %v847 = vsel %vm823, %v845, %v846
        %v848 = vrot.slane %v803, 5
        %v849 = vrot.slane %v848, 4
        %v850 = vrot.slane %v484, 5
        %v851 = vsel %vm823, %v849, %v850
        %v852 = vrot.slane %v804, 5
        %v853 = vrot.slane %v852, 4
        %v854 = vrot.slane %v485, 5
        %v855 = vsel %vm823, %v853, %v854
        %s856 = scalar_lea.vmem [#allocation6], 4
        %v857 = vld [vmem:[%s856] sm:$0x3]
        %v858 = vunpack.c.l.b16 %v827
        %v859 = vunpack.c.l.b16 %v831
        %v860 = vunpack.c.l.b16 %v835
        %v861 = vunpack.c.l.b16 %v839
        %v862 = vunpack.c.l.b16 %v843
        %v863 = vunpack.c.l.b16 %v847
        %v864 = vunpack.c.l.b16 %v851
        %v865 = vunpack.c.l.b16 %v855
        %v866 = vpack.c.b16 %v859, %v858
        %v867 = vpack.c.b16 %v861, %v860
        %v868 = vpack.c.b16 %v863, %v862
        %v869 = vpack.c.b16 %v865, %v864
        %v871 = vsel %vm615, %v866, 0
        %v874 = vsel %vm615, %v867, 0
        %v877 = vsel %vm615, %v868, 0
        %v880 = vsel %vm615, %v869, 0
        %v883 = vsel %vm628, %v857, 0
        %885 = vmatprep.subr.bf16.mxu0 0
        %886 = vmatpush1.bf16.msra.mxu0 %v883
        %887 = vmatprep.subr.bf16.mxu0 0
        %888 = vmatpush1.bf16.msra.mxu0 0
        %889 = vmatprep.subr.bf16.mxu0 0
        %890 = vmatpush1.bf16.msra.mxu0 0
        %891 = vmatprep.subr.bf16.mxu0 0
        %892 = vmatpush1.bf16.msra.mxu0 0
        %893 = vmatprep.subr.bf16.mxu0 0
        %894 = vmatpush1.bf16.msra.mxu0 0
        %895 = vmatprep.subr.bf16.mxu0 0
        %896 = vmatpush1.bf16.msra.mxu0 0
        %897 = vmatprep.subr.bf16.mxu0 0
        %898 = vmatpush1.bf16.msra.mxu0 0
        %899 = vmatprep.subr.bf16.mxu0 0
        %900 = vmatpush1.bf16.msra.mxu0 0
        %901 = vmatprep.subr.bf16.mxu0 0
        %902 = vmatpush1.bf16.msra.mxu0 0
        %903 = vmatprep.subr.bf16.mxu0 0
        %904 = vmatpush1.bf16.msra.mxu0 0
        %905 = vmatprep.subr.bf16.mxu0 0
        %906 = vmatpush1.bf16.msra.mxu0 0
        %907 = vmatprep.subr.bf16.mxu0 0
        %908 = vmatpush1.bf16.msra.mxu0 0
        %909 = vmatprep.subr.bf16.mxu0 0
        %910 = vmatpush1.bf16.msra.mxu0 0
        %911 = vmatprep.subr.bf16.mxu0 0
        %912 = vmatpush1.bf16.msra.mxu0 0
        %913 = vmatprep.subr.bf16.mxu0 0
        %914 = vmatpush1.bf16.msra.mxu0 0
        %915 = vmatprep.subr.bf16.mxu0 0
        %916 = vmatpush1.bf16.msra.mxu0 0
        %917 = vmatprep.mubr.bf16.mxu0 0
        %918 = vmatmul.mubr.bf16.gmra.mrb[0].mxu0 %v871
        %v919 = vpop.f32.mrb[0].mxu0
        %v920 = vadd.f32 0.0, %v919
        %v921 = vpop.f32.mrb[0].mxu0
        %v922 = vpop.f32.mrb[0].mxu0
        %v923 = vadd.f32 0.0, %v922
        %v924 = vpop.f32.mrb[0].mxu0
        %925 = vmatprep.mubr.bf16.mxu0 0
        %926 = vmatmul.mubr.bf16.gmra.mrb[0].mxu0 %v874
        %v927 = vpop.f32.mrb[0].mxu0
        %v928 = vadd.f32 0.0, %v927
        %v929 = vpop.f32.mrb[0].mxu0
        %v930 = vpop.f32.mrb[0].mxu0
        %v931 = vadd.f32 0.0, %v930
        %v932 = vpop.f32.mrb[0].mxu0
        %933 = vmatprep.mubr.bf16.mxu0 0
        %934 = vmatmul.mubr.bf16.gmra.mrb[0].mxu0 %v877
        %v935 = vpop.f32.mrb[0].mxu0
        %v936 = vadd.f32 0.0, %v935
        %v937 = vpop.f32.mrb[0].mxu0
        %v938 = vpop.f32.mrb[0].mxu0
        %v939 = vadd.f32 0.0, %v938
        %v940 = vpop.f32.mrb[0].mxu0
        %941 = vmatprep.mubr.bf16.mxu0 0
        %942 = vmatmul.mubr.bf16.gmra.mrb[0].mxu0 %v880
        %v943 = vpop.f32.mrb[0].mxu0
        %v944 = vadd.f32 0.0, %v943
        %v945 = vpop.f32.mrb[0].mxu0
        %v946 = vpop.f32.mrb[0].mxu0
        %v947 = vadd.f32 0.0, %v946
        %v948 = vpop.f32.mrb[0].mxu0
        %949 = vdwg.mxu0
        %v950 = vadd.f32 %v767, %v920
        %v951 = vadd.f32 %v770, %v923
        %v952 = vadd.f32 %v775, %v928
        %v953 = vadd.f32 %v778, %v931
        %v954 = vadd.f32 %v783, %v936
        %v955 = vadd.f32 %v786, %v939
        %v956 = vadd.f32 %v791, %v944
        %v957 = vadd.f32 %v794, %v947
        %v958 = vld [vmem:[%s414] sm:$0xf]
        %v959 = vld [vmem:[%s414 + $0x8] sm:$0xf]
        %v960 = vld [vmem:[%s414 + $0x10] sm:$0xf]
        %v961 = vld [vmem:[%s414 + $0x18] sm:$0xf]
        %v962 = vld [vmem:[%s414 + $0x20] sm:$0xf]
        %v963 = vld [vmem:[%s414 + $0x28] sm:$0xf]
        %v964 = vld [vmem:[%s414 + $0x30] sm:$0xf]
        %v965 = vld [vmem:[%s414 + $0x38] sm:$0xf]
        %s966 = scalar_lea.vmem [#allocation6], 6
        %v967 = vld [vmem:[%s966] sm:$0x3]
        %v976 = vunpack.c.l.b16 %v958
        %v977 = vunpack.c.l.b16 %v959
        %v978 = vunpack.c.l.b16 %v960
        %v979 = vunpack.c.l.b16 %v961
        %v980 = vunpack.c.l.b16 %v962
        %v981 = vunpack.c.l.b16 %v963
        %v982 = vunpack.c.l.b16 %v964
        %v983 = vunpack.c.l.b16 %v965
        %v984 = vpack.c.b16 %v977, %v976
        %v985 = vpack.c.b16 %v979, %v978
        %v986 = vpack.c.b16 %v981, %v980
        %v987 = vpack.c.b16 %v983, %v982
        %v989 = vsel %vm615, %v984, 0
        %v992 = vsel %vm615, %v985, 0
        %v995 = vsel %vm615, %v986, 0
        %v998 = vsel %vm615, %v987, 0
        %v1001 = vsel %vm628, %v967, 0
        %1003 = vmatprep.subr.bf16.mxu0 0
        %1004 = vmatpush1.bf16.msra.mxu0 %v1001
        %1005 = vmatprep.subr.bf16.mxu0 0
        %1006 = vmatpush1.bf16.msra.mxu0 0
        %1007 = vmatprep.subr.bf16.mxu0 0
        %1008 = vmatpush1.bf16.msra.mxu0 0
        %1009 = vmatprep.subr.bf16.mxu0 0
        %1010 = vmatpush1.bf16.msra.mxu0 0
        %1011 = vmatprep.subr.bf16.mxu0 0
        %1012 = vmatpush1.bf16.msra.mxu0 0
        %1013 = vmatprep.subr.bf16.mxu0 0
        %1014 = vmatpush1.bf16.msra.mxu0 0
        %1015 = vmatprep.subr.bf16.mxu0 0
        %1016 = vmatpush1.bf16.msra.mxu0 0
        %1017 = vmatprep.subr.bf16.mxu0 0
        %1018 = vmatpush1.bf16.msra.mxu0 0
        %1019 = vmatprep.subr.bf16.mxu0 0
        %1020 = vmatpush1.bf16.msra.mxu0 0
        %1021 = vmatprep.subr.bf16.mxu0 0
        %1022 = vmatpush1.bf16.msra.mxu0 0
        %1023 = vmatprep.subr.bf16.mxu0 0
        %1024 = vmatpush1.bf16.msra.mxu0 0
        %1025 = vmatprep.subr.bf16.mxu0 0
        %1026 = vmatpush1.bf16.msra.mxu0 0
        %1027 = vmatprep.subr.bf16.mxu0 0
        %1028 = vmatpush1.bf16.msra.mxu0 0
        %1029 = vmatprep.subr.bf16.mxu0 0
        %1030 = vmatpush1.bf16.msra.mxu0 0
        %1031 = vmatprep.subr.bf16.mxu0 0
        %1032 = vmatpush1.bf16.msra.mxu0 0
        %1033 = vmatprep.subr.bf16.mxu0 0
        %1034 = vmatpush1.bf16.msra.mxu0 0
        %1035 = vmatprep.mubr.bf16.mxu0 0
        %1036 = vmatmul.mubr.bf16.gmra.mrb[0].mxu0 %v989
        %v1037 = vpop.f32.mrb[0].mxu0
        %v1038 = vadd.f32 0.0, %v1037
        %v1039 = vpop.f32.mrb[0].mxu0
        %v1040 = vpop.f32.mrb[0].mxu0
        %v1041 = vadd.f32 0.0, %v1040
        %v1042 = vpop.f32.mrb[0].mxu0
        %1043 = vmatprep.mubr.bf16.mxu0 0
        %1044 = vmatmul.mubr.bf16.gmra.mrb[0].mxu0 %v992
        %v1045 = vpop.f32.mrb[0].mxu0
        %v1046 = vadd.f32 0.0, %v1045
        %v1047 = vpop.f32.mrb[0].mxu0
        %v1048 = vpop.f32.mrb[0].mxu0
        %v1049 = vadd.f32 0.0, %v1048
        %v1050 = vpop.f32.mrb[0].mxu0
        %1051 = vmatprep.mubr.bf16.mxu0 0
        %1052 = vmatmul.mubr.bf16.gmra.mrb[0].mxu0 %v995
        %v1053 = vpop.f32.mrb[0].mxu0
        %v1054 = vadd.f32 0.0, %v1053
        %v1055 = vpop.f32.mrb[0].mxu0
        %v1056 = vpop.f32.mrb[0].mxu0
        %v1057 = vadd.f32 0.0, %v1056
        %v1058 = vpop.f32.mrb[0].mxu0
        %1059 = vmatprep.mubr.bf16.mxu0 0
        %1060 = vmatmul.mubr.bf16.gmra.mrb[0].mxu0 %v998
        %v1061 = vpop.f32.mrb[0].mxu0
        %v1062 = vadd.f32 0.0, %v1061
        %v1063 = vpop.f32.mrb[0].mxu0
        %v1064 = vpop.f32.mrb[0].mxu0
        %v1065 = vadd.f32 0.0, %v1064
        %v1066 = vpop.f32.mrb[0].mxu0
        %1067 = vdwg.mxu0
        %v1068 = vadd.f32 %v950, %v1038
        %v1069 = vadd.f32 %v951, %v1041
        %v1070 = vadd.f32 %v952, %v1046
        %v1071 = vadd.f32 %v953, %v1049
        %v1072 = vadd.f32 %v954, %v1054
        %v1073 = vadd.f32 %v955, %v1057
        %v1074 = vadd.f32 %v956, %v1062
        %v1075 = vadd.f32 %v957, %v1065
        %v1076 = vld [vmem:[%s414] sm:$0xf]
        %v1077 = vld [vmem:[%s414 + $0x4] sm:$0x1]
        %v1078 = vld [vmem:[%s414 + $0x8] sm:$0xf]
        %v1079 = vld [vmem:[%s414 + $0xc] sm:$0x1]
        %v1080 = vld [vmem:[%s414 + $0x10] sm:$0xf]
        %v1081 = vld [vmem:[%s414 + $0x14] sm:$0x1]
        %v1082 = vld [vmem:[%s414 + $0x18] sm:$0xf]
        %v1083 = vld [vmem:[%s414 + $0x1c] sm:$0x1]
        %v1084 = vld [vmem:[%s414 + $0x20] sm:$0xf]
        %v1085 = vld [vmem:[%s414 + $0x24] sm:$0x1]
        %v1086 = vld [vmem:[%s414 + $0x28] sm:$0xf]
        %v1087 = vld [vmem:[%s414 + $0x2c] sm:$0x1]
        %v1088 = vld [vmem:[%s414 + $0x30] sm:$0xf]
        %v1089 = vld [vmem:[%s414 + $0x34] sm:$0x1]
        %v1090 = vld [vmem:[%s414 + $0x38] sm:$0xf]
        %v1091 = vld [vmem:[%s414 + $0x3c] sm:$0x1]
        %v1093 = vshrl.u32 %v1076, 16
        %v1095 = vrot.slane %v1093, 4
        %v1096 = vshll.u32 %v1076, 16
        %v1098 = vrot.slane %v1096, 5
        %v1099 = vor.u32 %v1095, %v1098
        %v1100 = vrot.slane %v1099, 4
        %v1102 = vshll.u32 %v1077, 16
        %v1104 = vrot.slane %v1102, 5
        %v1105 = vsel %vm488, %v1100, %v1104
        %v1107 = vshrl.u32 %v1078, 16
        %v1109 = vrot.slane %v1107, 4
        %v1110 = vshll.u32 %v1078, 16
        %v1112 = vrot.slane %v1110, 5
        %v1113 = vor.u32 %v1109, %v1112
        %v1114 = vrot.slane %v1113, 4
        %v1116 = vshll.u32 %v1079, 16
        %v1118 = vrot.slane %v1116, 5
        %v1119 = vsel %vm488, %v1114, %v1118
        %v1121 = vshrl.u32 %v1080, 16
        %v1123 = vrot.slane %v1121, 4
        %v1124 = vshll.u32 %v1080, 16
        %v1126 = vrot.slane %v1124, 5
        %v1127 = vor.u32 %v1123, %v1126
        %v1128 = vrot.slane %v1127, 4
        %v1130 = vshll.u32 %v1081, 16
        %v1132 = vrot.slane %v1130, 5
        %v1133 = vsel %vm488, %v1128, %v1132
        %v1135 = vshrl.u32 %v1082, 16
        %v1137 = vrot.slane %v1135, 4
        %v1138 = vshll.u32 %v1082, 16
        %v1140 = vrot.slane %v1138, 5
        %v1141 = vor.u32 %v1137, %v1140
        %v1142 = vrot.slane %v1141, 4
        %v1144 = vshll.u32 %v1083, 16
        %v1146 = vrot.slane %v1144, 5
        %v1147 = vsel %vm488, %v1142, %v1146
        %v1149 = vshrl.u32 %v1084, 16
        %v1151 = vrot.slane %v1149, 4
        %v1152 = vshll.u32 %v1084, 16
        %v1154 = vrot.slane %v1152, 5
        %v1155 = vor.u32 %v1151, %v1154
        %v1156 = vrot.slane %v1155, 4
        %v1158 = vshll.u32 %v1085, 16
        %v1160 = vrot.slane %v1158, 5
        %v1161 = vsel %vm488, %v1156, %v1160
        %v1163 = vshrl.u32 %v1086, 16
        %v1165 = vrot.slane %v1163, 4
        %v1166 = vshll.u32 %v1086, 16
        %v1168 = vrot.slane %v1166, 5
        %v1169 = vor.u32 %v1165, %v1168
        %v1170 = vrot.slane %v1169, 4
        %v1172 = vshll.u32 %v1087, 16
        %v1174 = vrot.slane %v1172, 5
        %v1175 = vsel %vm488, %v1170, %v1174
        %v1177 = vshrl.u32 %v1088, 16
        %v1179 = vrot.slane %v1177, 4
        %v1180 = vshll.u32 %v1088, 16
        %v1182 = vrot.slane %v1180, 5
        %v1183 = vor.u32 %v1179, %v1182
        %v1184 = vrot.slane %v1183, 4
        %v1186 = vshll.u32 %v1089, 16
        %v1188 = vrot.slane %v1186, 5
        %v1189 = vsel %vm488, %v1184, %v1188
        %v1191 = vshrl.u32 %v1090, 16
        %v1193 = vrot.slane %v1191, 4
        %v1194 = vshll.u32 %v1090, 16
        %v1196 = vrot.slane %v1194, 5
        %v1197 = vor.u32 %v1193, %v1196
        %v1198 = vrot.slane %v1197, 4
        %v1200 = vshll.u32 %v1091, 16
        %v1202 = vrot.slane %v1200, 5
        %v1203 = vsel %vm488, %v1198, %v1202
        %s1204 = scalar_lea.vmem [#allocation6], 8
        %v1205 = vld [vmem:[%s1204] sm:$0x3]
        %v1206 = vunpack.c.l.b16 %v1105
        %v1207 = vunpack.c.l.b16 %v1119
        %v1208 = vunpack.c.l.b16 %v1133
        %v1209 = vunpack.c.l.b16 %v1147
        %v1210 = vunpack.c.l.b16 %v1161
        %v1211 = vunpack.c.l.b16 %v1175
        %v1212 = vunpack.c.l.b16 %v1189
        %v1213 = vunpack.c.l.b16 %v1203
        %v1214 = vpack.c.b16 %v1207, %v1206
        %v1215 = vpack.c.b16 %v1209, %v1208
        %v1216 = vpack.c.b16 %v1211, %v1210
        %v1217 = vpack.c.b16 %v1213, %v1212
        %v1219 = vsel %vm615, %v1214, 0
        %v1222 = vsel %vm615, %v1215, 0
        %v1225 = vsel %vm615, %v1216, 0
        %v1228 = vsel %vm615, %v1217, 0
        %v1231 = vsel %vm628, %v1205, 0
        %1233 = vmatprep.subr.bf16.mxu0 0
        %1234 = vmatpush1.bf16.msra.mxu0 %v1231
        %1235 = vmatprep.subr.bf16.mxu0 0
        %1236 = vmatpush1.bf16.msra.mxu0 0
        %1237 = vmatprep.subr.bf16.mxu0 0
        %1238 = vmatpush1.bf16.msra.mxu0 0
        %1239 = vmatprep.subr.bf16.mxu0 0
        %1240 = vmatpush1.bf16.msra.mxu0 0
        %1241 = vmatprep.subr.bf16.mxu0 0
        %1242 = vmatpush1.bf16.msra.mxu0 0
        %1243 = vmatprep.subr.bf16.mxu0 0
        %1244 = vmatpush1.bf16.msra.mxu0 0
        %1245 = vmatprep.subr.bf16.mxu0 0
        %1246 = vmatpush1.bf16.msra.mxu0 0
        %1247 = vmatprep.subr.bf16.mxu0 0
        %1248 = vmatpush1.bf16.msra.mxu0 0
        %1249 = vmatprep.subr.bf16.mxu0 0
        %1250 = vmatpush1.bf16.msra.mxu0 0
        %1251 = vmatprep.subr.bf16.mxu0 0
        %1252 = vmatpush1.bf16.msra.mxu0 0
        %1253 = vmatprep.subr.bf16.mxu0 0
        %1254 = vmatpush1.bf16.msra.mxu0 0
        %1255 = vmatprep.subr.bf16.mxu0 0
        %1256 = vmatpush1.bf16.msra.mxu0 0
        %1257 = vmatprep.subr.bf16.mxu0 0
        %1258 = vmatpush1.bf16.msra.mxu0 0
        %1259 = vmatprep.subr.bf16.mxu0 0
        %1260 = vmatpush1.bf16.msra.mxu0 0
        %1261 = vmatprep.subr.bf16.mxu0 0
        %1262 = vmatpush1.bf16.msra.mxu0 0
        %1263 = vmatprep.subr.bf16.mxu0 0
        %1264 = vmatpush1.bf16.msra.mxu0 0
        %1265 = vmatprep.mubr.bf16.mxu0 0
        %1266 = vmatmul.mubr.bf16.gmra.mrb[0].mxu0 %v1219
        %v1267 = vpop.f32.mrb[0].mxu0
        %v1268 = vadd.f32 0.0, %v1267
        %v1269 = vpop.f32.mrb[0].mxu0
        %v1270 = vpop.f32.mrb[0].mxu0
        %v1271 = vadd.f32 0.0, %v1270
        %v1272 = vpop.f32.mrb[0].mxu0
        %1273 = vmatprep.mubr.bf16.mxu0 0
        %1274 = vmatmul.mubr.bf16.gmra.mrb[0].mxu0 %v1222
        %v1275 = vpop.f32.mrb[0].mxu0
        %v1276 = vadd.f32 0.0, %v1275
        %v1277 = vpop.f32.mrb[0].mxu0
        %v1278 = vpop.f32.mrb[0].mxu0
        %v1279 = vadd.f32 0.0, %v1278
        %v1280 = vpop.f32.mrb[0].mxu0
        %1281 = vmatprep.mubr.bf16.mxu0 0
        %1282 = vmatmul.mubr.bf16.gmra.mrb[0].mxu0 %v1225
        %v1283 = vpop.f32.mrb[0].mxu0
        %v1284 = vadd.f32 0.0, %v1283
        %v1285 = vpop.f32.mrb[0].mxu0
        %v1286 = vpop.f32.mrb[0].mxu0
        %v1287 = vadd.f32 0.0, %v1286
        %v1288 = vpop.f32.mrb[0].mxu0
        %1289 = vmatprep.mubr.bf16.mxu0 0
        %1290 = vmatmul.mubr.bf16.gmra.mrb[0].mxu0 %v1228
        %v1291 = vpop.f32.mrb[0].mxu0
        %v1292 = vadd.f32 0.0, %v1291
        %v1293 = vpop.f32.mrb[0].mxu0
        %v1294 = vpop.f32.mrb[0].mxu0
        %v1295 = vadd.f32 0.0, %v1294
        %v1296 = vpop.f32.mrb[0].mxu0
        %1297 = vdwg.mxu0
        %v1298 = vadd.f32 %v1068, %v1268
        %v1299 = vadd.f32 %v1069, %v1271
        %v1300 = vadd.f32 %v1070, %v1276
        %v1301 = vadd.f32 %v1071, %v1279
        %v1302 = vadd.f32 %v1072, %v1284
        %v1303 = vadd.f32 %v1073, %v1287
        %v1304 = vadd.f32 %v1074, %v1292
        %v1305 = vadd.f32 %v1075, %v1295
        %v1306 = vld [vmem:[%s414] sm:$0xe]
        %v1307 = vld [vmem:[%s414 + $0x8] sm:$0xe]
        %v1308 = vld [vmem:[%s414 + $0x10] sm:$0xe]
        %v1309 = vld [vmem:[%s414 + $0x18] sm:$0xe]
        %v1310 = vld [vmem:[%s414 + $0x20] sm:$0xe]
        %v1311 = vld [vmem:[%s414 + $0x28] sm:$0xe]
        %v1312 = vld [vmem:[%s414 + $0x30] sm:$0xe]
        %v1313 = vld [vmem:[%s414 + $0x38] sm:$0xe]
        %v1330 = vrot.slane %v1306, 5
        %v1331 = vrot.slane %v1330, 4
        %v1332 = vrot.slane %v1077, 5
        %v1333 = vsel %vm823, %v1331, %v1332
        %v1334 = vrot.slane %v1307, 5
        %v1335 = vrot.slane %v1334, 4
        %v1336 = vrot.slane %v1079, 5
        %v1337 = vsel %vm823, %v1335, %v1336
        %v1338 = vrot.slane %v1308, 5
        %v1339 = vrot.slane %v1338, 4
        %v1340 = vrot.slane %v1081, 5
        %v1341 = vsel %vm823, %v1339, %v1340
        %v1342 = vrot.slane %v1309, 5
        %v1343 = vrot.slane %v1342, 4
        %v1344 = vrot.slane %v1083, 5
        %v1345 = vsel %vm823, %v1343, %v1344
        %v1346 = vrot.slane %v1310, 5
        %v1347 = vrot.slane %v1346, 4
        %v1348 = vrot.slane %v1085, 5
        %v1349 = vsel %vm823, %v1347, %v1348
        %v1350 = vrot.slane %v1311, 5
        %v1351 = vrot.slane %v1350, 4
        %v1352 = vrot.slane %v1087, 5
        %v1353 = vsel %vm823, %v1351, %v1352
        %v1354 = vrot.slane %v1312, 5
        %v1355 = vrot.slane %v1354, 4
        %v1356 = vrot.slane %v1089, 5
        %v1357 = vsel %vm823, %v1355, %v1356
        %v1358 = vrot.slane %v1313, 5
        %v1359 = vrot.slane %v1358, 4
        %v1360 = vrot.slane %v1091, 5
        %v1361 = vsel %vm823, %v1359, %v1360
        %s1362 = scalar_lea.vmem [#allocation6], 10
        %v1363 = vld [vmem:[%s1362] sm:$0x3]
        %v1364 = vunpack.c.l.b16 %v1333
        %v1365 = vunpack.c.l.b16 %v1337
        %v1366 = vunpack.c.l.b16 %v1341
        %v1367 = vunpack.c.l.b16 %v1345
        %v1368 = vunpack.c.l.b16 %v1349
        %v1369 = vunpack.c.l.b16 %v1353
        %v1370 = vunpack.c.l.b16 %v1357
        %v1371 = vunpack.c.l.b16 %v1361
        %v1372 = vpack.c.b16 %v1365, %v1364
        %v1373 = vpack.c.b16 %v1367, %v1366
        %v1374 = vpack.c.b16 %v1369, %v1368
        %v1375 = vpack.c.b16 %v1371, %v1370
        %v1377 = vsel %vm615, %v1372, 0
        %v1380 = vsel %vm615, %v1373, 0
        %v1383 = vsel %vm615, %v1374, 0
        %v1386 = vsel %vm615, %v1375, 0
        %v1389 = vsel %vm628, %v1363, 0
        %1391 = vmatprep.subr.bf16.mxu0 0
        %1392 = vmatpush1.bf16.msra.mxu0 %v1389
        %1393 = vmatprep.subr.bf16.mxu0 0
        %1394 = vmatpush1.bf16.msra.mxu0 0
        %1395 = vmatprep.subr.bf16.mxu0 0
        %1396 = vmatpush1.bf16.msra.mxu0 0
        %1397 = vmatprep.subr.bf16.mxu0 0
        %1398 = vmatpush1.bf16.msra.mxu0 0
        %1399 = vmatprep.subr.bf16.mxu0 0
        %1400 = vmatpush1.bf16.msra.mxu0 0
        %1401 = vmatprep.subr.bf16.mxu0 0
        %1402 = vmatpush1.bf16.msra.mxu0 0
        %1403 = vmatprep.subr.bf16.mxu0 0
        %1404 = vmatpush1.bf16.msra.mxu0 0
        %1405 = vmatprep.subr.bf16.mxu0 0
        %1406 = vmatpush1.bf16.msra.mxu0 0
        %1407 = vmatprep.subr.bf16.mxu0 0
        %1408 = vmatpush1.bf16.msra.mxu0 0
        %1409 = vmatprep.subr.bf16.mxu0 0
        %1410 = vmatpush1.bf16.msra.mxu0 0
        %1411 = vmatprep.subr.bf16.mxu0 0
        %1412 = vmatpush1.bf16.msra.mxu0 0
        %1413 = vmatprep.subr.bf16.mxu0 0
        %1414 = vmatpush1.bf16.msra.mxu0 0
        %1415 = vmatprep.subr.bf16.mxu0 0
        %1416 = vmatpush1.bf16.msra.mxu0 0
        %1417 = vmatprep.subr.bf16.mxu0 0
        %1418 = vmatpush1.bf16.msra.mxu0 0
        %1419 = vmatprep.subr.bf16.mxu0 0
        %1420 = vmatpush1.bf16.msra.mxu0 0
        %1421 = vmatprep.subr.bf16.mxu0 0
        %1422 = vmatpush1.bf16.msra.mxu0 0
        %1423 = vmatprep.mubr.bf16.mxu0 0
        %1424 = vmatmul.mubr.bf16.gmra.mrb[0].mxu0 %v1377
        %v1425 = vpop.f32.mrb[0].mxu0
        %v1426 = vadd.f32 0.0, %v1425
        %v1427 = vpop.f32.mrb[0].mxu0
        %v1428 = vpop.f32.mrb[0].mxu0
        %v1429 = vadd.f32 0.0, %v1428
        %v1430 = vpop.f32.mrb[0].mxu0
        %1431 = vmatprep.mubr.bf16.mxu0 0
        %1432 = vmatmul.mubr.bf16.gmra.mrb[0].mxu0 %v1380
        %v1433 = vpop.f32.mrb[0].mxu0
        %v1434 = vadd.f32 0.0, %v1433
        %v1435 = vpop.f32.mrb[0].mxu0
        %v1436 = vpop.f32.mrb[0].mxu0
        %v1437 = vadd.f32 0.0, %v1436
        %v1438 = vpop.f32.mrb[0].mxu0
        %1439 = vmatprep.mubr.bf16.mxu0 0
        %1440 = vmatmul.mubr.bf16.gmra.mrb[0].mxu0 %v1383
        %v1441 = vpop.f32.mrb[0].mxu0
        %v1442 = vadd.f32 0.0, %v1441
        %v1443 = vpop.f32.mrb[0].mxu0
        %v1444 = vpop.f32.mrb[0].mxu0
        %v1445 = vadd.f32 0.0, %v1444
        %v1446 = vpop.f32.mrb[0].mxu0
        %1447 = vmatprep.mubr.bf16.mxu0 0
        %1448 = vmatmul.mubr.bf16.gmra.mrb[0].mxu0 %v1386
        %v1449 = vpop.f32.mrb[0].mxu0
        %v1450 = vadd.f32 0.0, %v1449
        %v1451 = vpop.f32.mrb[0].mxu0
        %v1452 = vpop.f32.mrb[0].mxu0
        %v1453 = vadd.f32 0.0, %v1452
        %v1454 = vpop.f32.mrb[0].mxu0
        %1455 = vdwg.mxu0
        %v1456 = vadd.f32 %v1298, %v1426
        %v1457 = vadd.f32 %v1299, %v1429
        %v1458 = vadd.f32 %v1300, %v1434
        %v1459 = vadd.f32 %v1301, %v1437
        %v1460 = vadd.f32 %v1302, %v1442
        %v1461 = vadd.f32 %v1303, %v1445
        %v1462 = vadd.f32 %v1304, %v1450
        %v1463 = vadd.f32 %v1305, %v1453
        %s1464 = scalar_lea.vmem [#allocation2], 16
        %v1465 = vld [vmem:[%s1464] sm:$0xf]
        %v1466 = vld [vmem:[%s1464 + $0x8] sm:$0xf]
        %v1467 = vld [vmem:[%s1464 + $0x10] sm:$0xf]
        %v1468 = vld [vmem:[%s1464 + $0x18] sm:$0xf]
        %v1469 = vld [vmem:[%s1464 + $0x20] sm:$0xf]
        %v1470 = vld [vmem:[%s1464 + $0x28] sm:$0xf]
        %v1471 = vld [vmem:[%s1464 + $0x30] sm:$0xf]
        %v1472 = vld [vmem:[%s1464 + $0x38] sm:$0xf]
        %s1473 = scalar_lea.vmem [#allocation6], 12
        %v1474 = vld [vmem:[%s1473] sm:$0x3]
        %v1483 = vunpack.c.l.b16 %v1465
        %v1484 = vunpack.c.l.b16 %v1466
        %v1485 = vunpack.c.l.b16 %v1467
        %v1486 = vunpack.c.l.b16 %v1468
        %v1487 = vunpack.c.l.b16 %v1469
        %v1488 = vunpack.c.l.b16 %v1470
        %v1489 = vunpack.c.l.b16 %v1471
        %v1490 = vunpack.c.l.b16 %v1472
        %v1491 = vpack.c.b16 %v1484, %v1483
        %v1492 = vpack.c.b16 %v1486, %v1485
        %v1493 = vpack.c.b16 %v1488, %v1487
        %v1494 = vpack.c.b16 %v1490, %v1489
        %v1496 = vsel %vm615, %v1491, 0
        %v1499 = vsel %vm615, %v1492, 0
        %v1502 = vsel %vm615, %v1493, 0
        %v1505 = vsel %vm615, %v1494, 0
        %v1508 = vsel %vm628, %v1474, 0
        %1510 = vmatprep.subr.bf16.mxu0 0
        %1511 = vmatpush1.bf16.msra.mxu0 %v1508
        %1512 = vmatprep.subr.bf16.mxu0 0
        %1513 = vmatpush1.bf16.msra.mxu0 0
        %1514 = vmatprep.subr.bf16.mxu0 0
        %1515 = vmatpush1.bf16.msra.mxu0 0
        %1516 = vmatprep.subr.bf16.mxu0 0
        %1517 = vmatpush1.bf16.msra.mxu0 0
        %1518 = vmatprep.subr.bf16.mxu0 0
        %1519 = vmatpush1.bf16.msra.mxu0 0
        %1520 = vmatprep.subr.bf16.mxu0 0
        %1521 = vmatpush1.bf16.msra.mxu0 0
        %1522 = vmatprep.subr.bf16.mxu0 0
        %1523 = vmatpush1.bf16.msra.mxu0 0
        %1524 = vmatprep.subr.bf16.mxu0 0
        %1525 = vmatpush1.bf16.msra.mxu0 0
        %1526 = vmatprep.subr.bf16.mxu0 0
        %1527 = vmatpush1.bf16.msra.mxu0 0
        %1528 = vmatprep.subr.bf16.mxu0 0
        %1529 = vmatpush1.bf16.msra.mxu0 0
        %1530 = vmatprep.subr.bf16.mxu0 0
        %1531 = vmatpush1.bf16.msra.mxu0 0
        %1532 = vmatprep.subr.bf16.mxu0 0
        %1533 = vmatpush1.bf16.msra.mxu0 0
        %1534 = vmatprep.subr.bf16.mxu0 0
        %1535 = vmatpush1.bf16.msra.mxu0 0
        %1536 = vmatprep.subr.bf16.mxu0 0
        %1537 = vmatpush1.bf16.msra.mxu0 0
        %1538 = vmatprep.subr.bf16.mxu0 0
        %1539 = vmatpush1.bf16.msra.mxu0 0
        %1540 = vmatprep.subr.bf16.mxu0 0
        %1541 = vmatpush1.bf16.msra.mxu0 0
        %1542 = vmatprep.mubr.bf16.mxu0 0
        %1543 = vmatmul.mubr.bf16.gmra.mrb[0].mxu0 %v1496
        %v1544 = vpop.f32.mrb[0].mxu0
        %v1545 = vadd.f32 0.0, %v1544
        %v1546 = vpop.f32.mrb[0].mxu0
        %v1547 = vpop.f32.mrb[0].mxu0
        %v1548 = vadd.f32 0.0, %v1547
        %v1549 = vpop.f32.mrb[0].mxu0
        %1550 = vmatprep.mubr.bf16.mxu0 0
        %1551 = vmatmul.mubr.bf16.gmra.mrb[0].mxu0 %v1499
        %v1552 = vpop.f32.mrb[0].mxu0
        %v1553 = vadd.f32 0.0, %v1552
        %v1554 = vpop.f32.mrb[0].mxu0
        %v1555 = vpop.f32.mrb[0].mxu0
        %v1556 = vadd.f32 0.0, %v1555
        %v1557 = vpop.f32.mrb[0].mxu0
        %1558 = vmatprep.mubr.bf16.mxu0 0
        %1559 = vmatmul.mubr.bf16.gmra.mrb[0].mxu0 %v1502
        %v1560 = vpop.f32.mrb[0].mxu0
        %v1561 = vadd.f32 0.0, %v1560
        %v1562 = vpop.f32.mrb[0].mxu0
        %v1563 = vpop.f32.mrb[0].mxu0
        %v1564 = vadd.f32 0.0, %v1563
        %v1565 = vpop.f32.mrb[0].mxu0
        %1566 = vmatprep.mubr.bf16.mxu0 0
        %1567 = vmatmul.mubr.bf16.gmra.mrb[0].mxu0 %v1505
        %v1568 = vpop.f32.mrb[0].mxu0
        %v1569 = vadd.f32 0.0, %v1568
        %v1570 = vpop.f32.mrb[0].mxu0
        %v1571 = vpop.f32.mrb[0].mxu0
        %v1572 = vadd.f32 0.0, %v1571
        %v1573 = vpop.f32.mrb[0].mxu0
        %1574 = vdwg.mxu0
        %v1575 = vadd.f32 %v1456, %v1545
        %v1576 = vadd.f32 %v1457, %v1548
        %v1577 = vadd.f32 %v1458, %v1553
        %v1578 = vadd.f32 %v1459, %v1556
        %v1579 = vadd.f32 %v1460, %v1561
        %v1580 = vadd.f32 %v1461, %v1564
        %v1581 = vadd.f32 %v1462, %v1569
        %v1582 = vadd.f32 %v1463, %v1572
        %v1583 = vld [vmem:[%s1464] sm:$0xf]
        %v1584 = vld [vmem:[%s1464 + $0x4] sm:$0x1]
        %v1585 = vld [vmem:[%s1464 + $0x8] sm:$0xf]
        %v1586 = vld [vmem:[%s1464 + $0xc] sm:$0x1]
        %v1587 = vld [vmem:[%s1464 + $0x10] sm:$0xf]
        %v1588 = vld [vmem:[%s1464 + $0x14] sm:$0x1]
        %v1589 = vld [vmem:[%s1464 + $0x18] sm:$0xf]
        %v1590 = vld [vmem:[%s1464 + $0x1c] sm:$0x1]
        %v1591 = vld [vmem:[%s1464 + $0x20] sm:$0xf]
        %v1592 = vld [vmem:[%s1464 + $0x24] sm:$0x1]
        %v1593 = vld [vmem:[%s1464 + $0x28] sm:$0xf]
        %v1594 = vld [vmem:[%s1464 + $0x2c] sm:$0x1]
        %v1595 = vld [vmem:[%s1464 + $0x30] sm:$0xf]
        %v1596 = vld [vmem:[%s1464 + $0x34] sm:$0x1]
        %v1597 = vld [vmem:[%s1464 + $0x38] sm:$0xf]
        %v1598 = vld [vmem:[%s1464 + $0x3c] sm:$0x1]
        %v1600 = vshrl.u32 %v1583, 16
        %v1602 = vrot.slane %v1600, 4
        %v1603 = vshll.u32 %v1583, 16
        %v1605 = vrot.slane %v1603, 5
        %v1606 = vor.u32 %v1602, %v1605
        %v1607 = vrot.slane %v1606, 4
        %v1609 = vshll.u32 %v1584, 16
        %v1611 = vrot.slane %v1609, 5
        %v1612 = vsel %vm488, %v1607, %v1611
        %v1614 = vshrl.u32 %v1585, 16
        %v1616 = vrot.slane %v1614, 4
        %v1617 = vshll.u32 %v1585, 16
        %v1619 = vrot.slane %v1617, 5
        %v1620 = vor.u32 %v1616, %v1619
        %v1621 = vrot.slane %v1620, 4
        %v1623 = vshll.u32 %v1586, 16
        %v1625 = vrot.slane %v1623, 5
        %v1626 = vsel %vm488, %v1621, %v1625
        %v1628 = vshrl.u32 %v1587, 16
        %v1630 = vrot.slane %v1628, 4
        %v1631 = vshll.u32 %v1587, 16
        %v1633 = vrot.slane %v1631, 5
        %v1634 = vor.u32 %v1630, %v1633
        %v1635 = vrot.slane %v1634, 4
        %v1637 = vshll.u32 %v1588, 16
        %v1639 = vrot.slane %v1637, 5
        %v1640 = vsel %vm488, %v1635, %v1639
        %v1642 = vshrl.u32 %v1589, 16
        %v1644 = vrot.slane %v1642, 4
        %v1645 = vshll.u32 %v1589, 16
        %v1647 = vrot.slane %v1645, 5
        %v1648 = vor.u32 %v1644, %v1647
        %v1649 = vrot.slane %v1648, 4
        %v1651 = vshll.u32 %v1590, 16
        %v1653 = vrot.slane %v1651, 5
        %v1654 = vsel %vm488, %v1649, %v1653
        %v1656 = vshrl.u32 %v1591, 16
        %v1658 = vrot.slane %v1656, 4
        %v1659 = vshll.u32 %v1591, 16
        %v1661 = vrot.slane %v1659, 5
        %v1662 = vor.u32 %v1658, %v1661
        %v1663 = vrot.slane %v1662, 4
        %v1665 = vshll.u32 %v1592, 16
        %v1667 = vrot.slane %v1665, 5
        %v1668 = vsel %vm488, %v1663, %v1667
        %v1670 = vshrl.u32 %v1593, 16
        %v1672 = vrot.slane %v1670, 4
        %v1673 = vshll.u32 %v1593, 16
        %v1675 = vrot.slane %v1673, 5
        %v1676 = vor.u32 %v1672, %v1675
        %v1677 = vrot.slane %v1676, 4
        %v1679 = vshll.u32 %v1594, 16
        %v1681 = vrot.slane %v1679, 5
        %v1682 = vsel %vm488, %v1677, %v1681
        %v1684 = vshrl.u32 %v1595, 16
        %v1686 = vrot.slane %v1684, 4
        %v1687 = vshll.u32 %v1595, 16
        %v1689 = vrot.slane %v1687, 5
        %v1690 = vor.u32 %v1686, %v1689
        %v1691 = vrot.slane %v1690, 4
        %v1693 = vshll.u32 %v1596, 16
        %v1695 = vrot.slane %v1693, 5
        %v1696 = vsel %vm488, %v1691, %v1695
        %v1698 = vshrl.u32 %v1597, 16
        %v1700 = vrot.slane %v1698, 4
        %v1701 = vshll.u32 %v1597, 16
        %v1703 = vrot.slane %v1701, 5
        %v1704 = vor.u32 %v1700, %v1703
        %v1705 = vrot.slane %v1704, 4
        %v1707 = vshll.u32 %v1598, 16
        %v1709 = vrot.slane %v1707, 5
        %v1710 = vsel %vm488, %v1705, %v1709
        %s1711 = scalar_lea.vmem [#allocation6], 14
        %v1712 = vld [vmem:[%s1711] sm:$0x3]
        %v1713 = vunpack.c.l.b16 %v1612
        %v1714 = vunpack.c.l.b16 %v1626
        %v1715 = vunpack.c.l.b16 %v1640
        %v1716 = vunpack.c.l.b16 %v1654
        %v1717 = vunpack.c.l.b16 %v1668
        %v1718 = vunpack.c.l.b16 %v1682
        %v1719 = vunpack.c.l.b16 %v1696
        %v1720 = vunpack.c.l.b16 %v1710
        %v1721 = vpack.c.b16 %v1714, %v1713
        %v1722 = vpack.c.b16 %v1716, %v1715
        %v1723 = vpack.c.b16 %v1718, %v1717
        %v1724 = vpack.c.b16 %v1720, %v1719
        %v1726 = vsel %vm615, %v1721, 0
        %v1729 = vsel %vm615, %v1722, 0
        %v1732 = vsel %vm615, %v1723, 0
        %v1735 = vsel %vm615, %v1724, 0
        %v1738 = vsel %vm628, %v1712, 0
        %1740 = vmatprep.subr.bf16.mxu0 0
        %1741 = vmatpush1.bf16.msra.mxu0 %v1738
        %1742 = vmatprep.subr.bf16.mxu0 0
        %1743 = vmatpush1.bf16.msra.mxu0 0
        %1744 = vmatprep.subr.bf16.mxu0 0
        %1745 = vmatpush1.bf16.msra.mxu0 0
        %1746 = vmatprep.subr.bf16.mxu0 0
        %1747 = vmatpush1.bf16.msra.mxu0 0
        %1748 = vmatprep.subr.bf16.mxu0 0
        %1749 = vmatpush1.bf16.msra.mxu0 0
        %1750 = vmatprep.subr.bf16.mxu0 0
        %1751 = vmatpush1.bf16.msra.mxu0 0
        %1752 = vmatprep.subr.bf16.mxu0 0
        %1753 = vmatpush1.bf16.msra.mxu0 0
        %1754 = vmatprep.subr.bf16.mxu0 0
        %1755 = vmatpush1.bf16.msra.mxu0 0
        %1756 = vmatprep.subr.bf16.mxu0 0
        %1757 = vmatpush1.bf16.msra.mxu0 0
        %1758 = vmatprep.subr.bf16.mxu0 0
        %1759 = vmatpush1.bf16.msra.mxu0 0
        %1760 = vmatprep.subr.bf16.mxu0 0
        %1761 = vmatpush1.bf16.msra.mxu0 0
        %1762 = vmatprep.subr.bf16.mxu0 0
        %1763 = vmatpush1.bf16.msra.mxu0 0
        %1764 = vmatprep.subr.bf16.mxu0 0
        %1765 = vmatpush1.bf16.msra.mxu0 0
        %1766 = vmatprep.subr.bf16.mxu0 0
        %1767 = vmatpush1.bf16.msra.mxu0 0
        %1768 = vmatprep.subr.bf16.mxu0 0
        %1769 = vmatpush1.bf16.msra.mxu0 0
        %1770 = vmatprep.subr.bf16.mxu0 0
        %1771 = vmatpush1.bf16.msra.mxu0 0
        %1772 = vmatprep.mubr.bf16.mxu0 0
        %1773 = vmatmul.mubr.bf16.gmra.mrb[0].mxu0 %v1726
        %v1774 = vpop.f32.mrb[0].mxu0
        %v1775 = vadd.f32 0.0, %v1774
        %v1776 = vpop.f32.mrb[0].mxu0
        %v1777 = vpop.f32.mrb[0].mxu0
        %v1778 = vadd.f32 0.0, %v1777
        %v1779 = vpop.f32.mrb[0].mxu0
        %1780 = vmatprep.mubr.bf16.mxu0 0
        %1781 = vmatmul.mubr.bf16.gmra.mrb[0].mxu0 %v1729
        %v1782 = vpop.f32.mrb[0].mxu0
        %v1783 = vadd.f32 0.0, %v1782
        %v1784 = vpop.f32.mrb[0].mxu0
        %v1785 = vpop.f32.mrb[0].mxu0
        %v1786 = vadd.f32 0.0, %v1785
        %v1787 = vpop.f32.mrb[0].mxu0
        %1788 = vmatprep.mubr.bf16.mxu0 0
        %1789 = vmatmul.mubr.bf16.gmra.mrb[0].mxu0 %v1732
        %v1790 = vpop.f32.mrb[0].mxu0
        %v1791 = vadd.f32 0.0, %v1790
        %v1792 = vpop.f32.mrb[0].mxu0
        %v1793 = vpop.f32.mrb[0].mxu0
        %v1794 = vadd.f32 0.0, %v1793
        %v1795 = vpop.f32.mrb[0].mxu0
        %1796 = vmatprep.mubr.bf16.mxu0 0
        %1797 = vmatmul.mubr.bf16.gmra.mrb[0].mxu0 %v1735
        %v1798 = vpop.f32.mrb[0].mxu0
        %v1799 = vadd.f32 0.0, %v1798
        %v1800 = vpop.f32.mrb[0].mxu0
        %v1801 = vpop.f32.mrb[0].mxu0
        %v1802 = vadd.f32 0.0, %v1801
        %v1803 = vpop.f32.mrb[0].mxu0
        %1804 = vdwg.mxu0
        %v1805 = vadd.f32 %v1575, %v1775
        %v1806 = vadd.f32 %v1576, %v1778
        %v1807 = vadd.f32 %v1577, %v1783
        %v1808 = vadd.f32 %v1578, %v1786
        %v1809 = vadd.f32 %v1579, %v1791
        %v1810 = vadd.f32 %v1580, %v1794
        %v1811 = vadd.f32 %v1581, %v1799
        %v1812 = vadd.f32 %v1582, %v1802
        %v1813 = vld [vmem:[%s1464] sm:$0xe]
        %v1814 = vld [vmem:[%s1464 + $0x8] sm:$0xe]
        %v1815 = vld [vmem:[%s1464 + $0x10] sm:$0xe]
        %v1816 = vld [vmem:[%s1464 + $0x18] sm:$0xe]
        %v1817 = vld [vmem:[%s1464 + $0x20] sm:$0xe]
        %v1818 = vld [vmem:[%s1464 + $0x28] sm:$0xe]
        %v1819 = vld [vmem:[%s1464 + $0x30] sm:$0xe]
        %v1820 = vld [vmem:[%s1464 + $0x38] sm:$0xe]
        %v1837 = vrot.slane %v1813, 5
        %v1838 = vrot.slane %v1837, 4
        %v1839 = vrot.slane %v1584, 5
        %v1840 = vsel %vm823, %v1838, %v1839
        %v1841 = vrot.slane %v1814, 5
        %v1842 = vrot.slane %v1841, 4
        %v1843 = vrot.slane %v1586, 5
        %v1844 = vsel %vm823, %v1842, %v1843
        %v1845 = vrot.slane %v1815, 5
        %v1846 = vrot.slane %v1845, 4
        %v1847 = vrot.slane %v1588, 5
        %v1848 = vsel %vm823, %v1846, %v1847
        %v1849 = vrot.slane %v1816, 5
        %v1850 = vrot.slane %v1849, 4
        %v1851 = vrot.slane %v1590, 5
        %v1852 = vsel %vm823, %v1850, %v1851
        %v1853 = vrot.slane %v1817, 5
        %v1854 = vrot.slane %v1853, 4
        %v1855 = vrot.slane %v1592, 5
        %v1856 = vsel %vm823, %v1854, %v1855
        %v1857 = vrot.slane %v1818, 5
        %v1858 = vrot.slane %v1857, 4
        %v1859 = vrot.slane %v1594, 5
        %v1860 = vsel %vm823, %v1858, %v1859
        %v1861 = vrot.slane %v1819, 5
        %v1862 = vrot.slane %v1861, 4
        %v1863 = vrot.slane %v1596, 5
        %v1864 = vsel %vm823, %v1862, %v1863
        %v1865 = vrot.slane %v1820, 5
        %v1866 = vrot.slane %v1865, 4
        %v1867 = vrot.slane %v1598, 5
        %v1868 = vsel %vm823, %v1866, %v1867
        %s1869 = scalar_lea.vmem [#allocation6], 16
        %v1870 = vld [vmem:[%s1869] sm:$0x3]
        %v1871 = vunpack.c.l.b16 %v1840
        %v1872 = vunpack.c.l.b16 %v1844
        %v1873 = vunpack.c.l.b16 %v1848
        %v1874 = vunpack.c.l.b16 %v1852
        %v1875 = vunpack.c.l.b16 %v1856
        %v1876 = vunpack.c.l.b16 %v1860
        %v1877 = vunpack.c.l.b16 %v1864
        %v1878 = vunpack.c.l.b16 %v1868
        %v1879 = vpack.c.b16 %v1872, %v1871
        %v1880 = vpack.c.b16 %v1874, %v1873
        %v1881 = vpack.c.b16 %v1876, %v1875
        %v1882 = vpack.c.b16 %v1878, %v1877
        %v1884 = vsel %vm615, %v1879, 0
        %v1887 = vsel %vm615, %v1880, 0
        %v1890 = vsel %vm615, %v1881, 0
        %v1893 = vsel %vm615, %v1882, 0
        %v1896 = vsel %vm628, %v1870, 0
        %1898 = vmatprep.subr.bf16.mxu0 0
        %1899 = vmatpush1.bf16.msra.mxu0 %v1896
        %1900 = vmatprep.subr.bf16.mxu0 0
        %1901 = vmatpush1.bf16.msra.mxu0 0
        %1902 = vmatprep.subr.bf16.mxu0 0
        %1903 = vmatpush1.bf16.msra.mxu0 0
        %1904 = vmatprep.subr.bf16.mxu0 0
        %1905 = vmatpush1.bf16.msra.mxu0 0
        %1906 = vmatprep.subr.bf16.mxu0 0
        %1907 = vmatpush1.bf16.msra.mxu0 0
        %1908 = vmatprep.subr.bf16.mxu0 0
        %1909 = vmatpush1.bf16.msra.mxu0 0
        %1910 = vmatprep.subr.bf16.mxu0 0
        %1911 = vmatpush1.bf16.msra.mxu0 0
        %1912 = vmatprep.subr.bf16.mxu0 0
        %1913 = vmatpush1.bf16.msra.mxu0 0
        %1914 = vmatprep.subr.bf16.mxu0 0
        %1915 = vmatpush1.bf16.msra.mxu0 0
        %1916 = vmatprep.subr.bf16.mxu0 0
        %1917 = vmatpush1.bf16.msra.mxu0 0
        %1918 = vmatprep.subr.bf16.mxu0 0
        %1919 = vmatpush1.bf16.msra.mxu0 0
        %1920 = vmatprep.subr.bf16.mxu0 0
        %1921 = vmatpush1.bf16.msra.mxu0 0
        %1922 = vmatprep.subr.bf16.mxu0 0
        %1923 = vmatpush1.bf16.msra.mxu0 0
        %1924 = vmatprep.subr.bf16.mxu0 0
        %1925 = vmatpush1.bf16.msra.mxu0 0
        %1926 = vmatprep.subr.bf16.mxu0 0
        %1927 = vmatpush1.bf16.msra.mxu0 0
        %1928 = vmatprep.subr.bf16.mxu0 0
        %1929 = vmatpush1.bf16.msra.mxu0 0
        %1930 = vmatprep.mubr.bf16.mxu0 0
        %1931 = vmatmul.mubr.bf16.gmra.mrb[0].mxu0 %v1884
        %v1932 = vpop.f32.mrb[0].mxu0
        %v1933 = vadd.f32 0.0, %v1932
        %v1934 = vpop.f32.mrb[0].mxu0
        %v1935 = vpop.f32.mrb[0].mxu0
        %v1936 = vadd.f32 0.0, %v1935
        %v1937 = vpop.f32.mrb[0].mxu0
        %1938 = vmatprep.mubr.bf16.mxu0 0
        %1939 = vmatmul.mubr.bf16.gmra.mrb[0].mxu0 %v1887
        %v1940 = vpop.f32.mrb[0].mxu0
        %v1941 = vadd.f32 0.0, %v1940
        %v1942 = vpop.f32.mrb[0].mxu0
        %v1943 = vpop.f32.mrb[0].mxu0
        %v1944 = vadd.f32 0.0, %v1943
        %v1945 = vpop.f32.mrb[0].mxu0
        %1946 = vmatprep.mubr.bf16.mxu0 0
        %1947 = vmatmul.mubr.bf16.gmra.mrb[0].mxu0 %v1890
        %v1948 = vpop.f32.mrb[0].mxu0
        %v1949 = vadd.f32 0.0, %v1948
        %v1950 = vpop.f32.mrb[0].mxu0
        %v1951 = vpop.f32.mrb[0].mxu0
        %v1952 = vadd.f32 0.0, %v1951
        %v1953 = vpop.f32.mrb[0].mxu0
        %1954 = vmatprep.mubr.bf16.mxu0 0
        %1955 = vmatmul.mubr.bf16.gmra.mrb[0].mxu0 %v1893
        %v1956 = vpop.f32.mrb[0].mxu0
        %v1957 = vadd.f32 0.0, %v1956
        %v1958 = vpop.f32.mrb[0].mxu0
        %v1959 = vpop.f32.mrb[0].mxu0
        %v1960 = vadd.f32 0.0, %v1959
        %v1961 = vpop.f32.mrb[0].mxu0
        %1962 = vdwg.mxu0
        %v1963 = vadd.f32 %v1805, %v1933
        %v1964 = vadd.f32 %v1806, %v1936
        %v1965 = vadd.f32 %v1807, %v1941
        %v1966 = vadd.f32 %v1808, %v1944
        %v1967 = vadd.f32 %v1809, %v1949
        %v1968 = vadd.f32 %v1810, %v1952
        %v1969 = vadd.f32 %v1811, %v1957
        %v1970 = vadd.f32 %v1812, %v1960
        %1971 = vst [vmem:[%s207] sm:$0xff] %v1963
        %1972 = vst [vmem:[%s207 + $0x8] sm:$0xff] %v1964
        %1973 = vst [vmem:[%s207 + $0x10] sm:$0xff] %v1965
        %1974 = vst [vmem:[%s207 + $0x18] sm:$0xff] %v1966
        %1975 = vst [vmem:[%s207 + $0x20] sm:$0xff] %v1967
        %1976 = vst [vmem:[%s207 + $0x28] sm:$0xff] %v1968
        %1977 = vst [vmem:[%s207 + $0x30] sm:$0xff] %v1969
        %1978 = vst [vmem:[%s207 + $0x38] sm:$0xff] %v1970
        %v1979 = vadd.f32 %v1963, %v1964
        %v1980 = vadd.f32 %v1979, %v1965
        %v1981 = vadd.f32 %v1980, %v1966
        %v1982 = vadd.f32 %v1981, %v1967
        %v1983 = vadd.f32 %v1982, %v1968
        %v1984 = vadd.f32 %v1983, %v1969
        %v1985 = vadd.f32 %v1984, %v1970
        %v1986 = vrot.slane %v1985, 4
        %v1987 = vadd.f32 %v1985, %v1986
        %v1988 = vrot.slane %v1987, 2
        %v1989 = vadd.f32 %v1987, %v1988
        %v1990 = vrot.slane %v1989, 1
        %v1991 = vadd.f32 %v1989, %v1990
        %1992 = vst [vmem:[%s214] sm:$0x1] %v1991
        %v1993 = vmul.f32 %v1963, %v1963
        %v1994 = vmul.f32 %v1964, %v1964
        %v1995 = vmul.f32 %v1965, %v1965
        %v1996 = vmul.f32 %v1966, %v1966
        %v1997 = vmul.f32 %v1967, %v1967
        %v1998 = vmul.f32 %v1968, %v1968
        %v1999 = vmul.f32 %v1969, %v1969
        %v2000 = vmul.f32 %v1970, %v1970
        %v2001 = vadd.f32 %v1993, %v1994
        %v2002 = vadd.f32 %v2001, %v1995
        %v2003 = vadd.f32 %v2002, %v1996
        %v2004 = vadd.f32 %v2003, %v1997
        %v2005 = vadd.f32 %v2004, %v1998
        %v2006 = vadd.f32 %v2005, %v1999
        %v2007 = vadd.f32 %v2006, %v2000
        %v2008 = vrot.slane %v2007, 4
        %v2009 = vadd.f32 %v2007, %v2008
        %v2010 = vrot.slane %v2009, 2
        %v2011 = vadd.f32 %v2009, %v2010
        %v2012 = vrot.slane %v2011, 1
        %v2013 = vadd.f32 %v2011, %v2012
        %2014 = vst [vmem:[%s214 + $0x1] sm:$0x1] %v2013
        %s2015 = sand.u32 %s80, 1
        %s2016 = scalar_lea.sflag [#allocation5], %s2015
        %s2017 = sand.u32 %s80, 1
        %s2018 = smul.addr %s2017, 64
        %s2019 = scalar_lea.vmem [#allocation8], %s2018
        %s2020 = sand.u32 %s106, 1
        %s2021 = scalar_lea.sflag [#allocation10], %s2020
        %s2022 = sand.u32 %s106, 1
        %s2023 = smul.addr %s2022, 2
        %s2024 = scalar_lea.vmem [#allocation9], %s2023
        // Predicated region
        $region37: #{tpu_custom_call.1} parent=27 // pred_check
          %p2025 = pneg %p90
        $region38: #{tpu_custom_call.1} parent=27 // pred_check_branch
          %2027 = sbr.rel (%p2025) target = $region40
        $region39: #{tpu_custom_call.1} parent=27 // pred_region
          %s2029 = ssub.s32 1024, 1024
          %2030 = vsyncadd %s2016, %s2029
          %s2031 = smul.addr %s25, 8
          %s2032 = smul.addr %s2031, 128
          %s2033 = scalar_lea.hbm %s2, %s2032
          %s2034 = sshll.u32 %s2019, 4
          %s2035 = int_to_ptr.vmem [resolvable:$true] %s2034
          %2040 = dma.vmem_to_hbm [thread:$0]  %s2035, 1024, %s2033, %s2016, 128, 128, 8
        $region40: #{tpu_custom_call.1} parent=27 // pred_fallthru
          _
        // Predicated region
        $region41: #{tpu_custom_call.1} parent=27 // pred_check
          %p2041 = pneg %p116
        $region42: #{tpu_custom_call.1} parent=27 // pred_check_branch
          %2043 = sbr.rel (%p2041) target = $region44
        $region43: #{tpu_custom_call.1} parent=27 // pred_region
          %s2045 = ssub.s32 32, 32
          %2046 = vsyncadd %s2021, %s2045
          %s2047 = smul.addr %s25, 32
          %s2048 = scalar_lea.hbm %s3, %s2047
          %s2050 = sshll.u32 %s2024, 4
          %s2051 = int_to_ptr.vmem [resolvable:$true] %s2050
          %2053 = dma.vmem_to_hbm [thread:$0]  %s2051, 32, %s2048, %s2021
        $region44: #{tpu_custom_call.1} parent=27 // pred_fallthru
          _
      $region28: #{tpu_custom_call.1} parent=5 // pred_fallthru
        _
      %p2054 = scmp.le.s32.totalorder 2, %s20
      // Predicated region
      $region45: #{tpu_custom_call.1} parent=5 // pred_check
        %p2055 = pneg %p2054
      $region46: #{tpu_custom_call.1} parent=5 // pred_check_branch
        %2057 = sbr.rel (%p2055) target = $region48
      $region47: #{tpu_custom_call.1} parent=5 // pred_region
        %s2058 = ssub.s32 %s20, 2
        // Predicated region
        $region49: #{tpu_custom_call.1} parent=47 // pred_check
          %p2059 = pneg %p96
        $region50: #{tpu_custom_call.1} parent=47 // pred_check_branch
          %2061 = sbr.rel (%p2059) target = $region52
        $region51: #{tpu_custom_call.1} parent=47 // pred_region
          %s2062 = sand.u32 %s81, 1
          %s2063 = scalar_lea.sflag [#allocation5], %s2062
          %s2064 = sand.u32 %s81, 1
          %s2065 = smul.addr %s2064, 64
          %s2066 = scalar_lea.vmem [#allocation8], %s2065
          %2067 = dma.done %s2063, 1024
        $region52: #{tpu_custom_call.1} parent=47 // pred_fallthru
          _
        // Predicated region
        $region53: #{tpu_custom_call.1} parent=47 // pred_check
          %p2068 = pneg %p122
        $region54: #{tpu_custom_call.1} parent=47 // pred_check_branch
          %2070 = sbr.rel (%p2068) target = $region56
        $region55: #{tpu_custom_call.1} parent=47 // pred_region
          %s2071 = sand.u32 %s107, 1
          %s2072 = scalar_lea.sflag [#allocation10], %s2071
          %s2073 = sand.u32 %s107, 1
          %s2074 = smul.addr %s2073, 2
          %s2075 = scalar_lea.vmem [#allocation9], %s2074
          %2076 = dma.done %s2072, 32
        $region56: #{tpu_custom_call.1} parent=47 // pred_fallthru
          _
      $region48: #{tpu_custom_call.1} parent=5 // pred_fallthru
        _
    $region6: #{tpu_custom_call.1} parent=1 // loop_footer
      %s24 = sadd.s32 1, %s20
    $region7: #{tpu_custom_call.1} parent=1 // loop_footer_branch
      %19 = sbr.rel target = $region3
    $region8: #{tpu_custom_call.1} parent=1 // loop_exit
      _
    %2077 = vsyncpa [#allocation4], 1
    %s2078 = scalar_lea.sflag [#allocation4], 1
    %2079 = vsyncpa %s2078, 1
    %2080 = vsyncpa [#allocation7], 1
    %2081 = vsyncpa [#allocation5], 1
    %s2082 = scalar_lea.sflag [#allocation5], 1
    %2083 = vsyncpa %s2082, 1
    %2084 = vsyncpa [#allocation10], 1
    %s2085 = scalar_lea.sflag [#allocation10], 1
    %2086 = vsyncpa %s2085, 1

</llo_original>
